<compile_context>
chip_gen: v7x
topology: tpu7x:2x2x1
jax: 0.10.0
libtpu: 0.0.40
codegen_flags: <defaults>
</compile_context>

<pallas_src>
import jax
import jax.numpy as jnp
from jax.experimental import pallas as pl
from jax.experimental.pallas import tpu as pltpu

SELU_ALPHA = 1.6732632423543772
SELU_SCALE = 1.0507009873554805
BN_EPS = 1e-5


def _selu(x):
    return SELU_SCALE * jnp.where(x > 0, x, SELU_ALPHA * (jnp.exp(x) - 1.0))


def _banded_conv_weights(w_oihw, W, C):
    """OIHW (C,C,3,3) -> (3, W*C, W*C) block-banded matrices, one per dy.

    B_dy[w_in*C+ci, w_out*C+co] = K[dy, dx, ci, co] with dx = w_in - w_out + 1
    (zero outside the band), so one row of the lane-dense activation (length
    W*C) times B_dy realizes the dx/channel part of the 3x3 conv entirely on
    the MXU.  Zero padding along W is implicit in the band structure.
    Pure wrapper-side weight plumbing (host/XLA, not in the kernel).
    """
    w_hwio = jnp.transpose(w_oihw.astype(jnp.float32), (2, 3, 1, 0))  # (3,3,Ci,Co)
    mats = []
    for dy in range(3):
        m = jnp.zeros((W * C, W * C), jnp.float32)
        for dx in range(3):
            sel = jnp.eye(W, W, k=1 - dx, dtype=jnp.float32)  # w_in = w_out + dx - 1
            m = m + jnp.kron(sel, w_hwio[dy, dx])
        mats.append(m)
    return jnp.stack(mats)


def _make_kernel(N, H, W, C):
    NH, WC = N * H, W * C
    inv_cnt = 1.0 / float(N * H * W)

    def kernel(x_ref, w1_ref, w2_ref, t_ref,
               g1_ref, be1_ref, g2_ref, be2_ref, o_ref):
        # x_ref / o_ref : (N*H, W*C)      lane-dense activations
        # w*_ref        : (3, W*C, W*C)   block-banded conv weights (per dy)
        # t_ref         : (W*C, W*C)      kron(ones(W,W), eye(C)) stat matrix
        # g*/be*_ref    : (1, W*C)        gamma / beta pre-tiled across W

        x = x_ref[...]                                        # (NH, WC)

        # Image-boundary validity masks for the H-shifts (computed once,
        # reused by both convs).  Row r belongs to image r // H.
        row = jax.lax.broadcasted_iota(jnp.int32, (NH, WC), 0)
        rmod = row % H
        top_ok = rmod != 0            # row r-1 is inside the same image
        bot_ok = rmod != (H - 1)      # row r+1 is inside the same image

        def conv(h, w_ref):
            # Sublane rolls (XLU) produce the rows above/below; masks zero the
            # rows that would cross an image (H-padding).  Three lane-dense
            # MXU matmuls finish the 3x3 conv; the accumulator is created by
            # the first matmul (no zero-fill + add).
            up = jnp.where(top_ok, pltpu.roll(h, shift=1, axis=0), 0.0)
            dn = jnp.where(bot_ok, pltpu.roll(h, shift=NH - 1, axis=0), 0.0)
            acc = jnp.dot(up, w_ref[0], preferred_element_type=jnp.float32)
            acc = acc + jnp.dot(h, w_ref[1], preferred_element_type=jnp.float32)
            acc = acc + jnp.dot(dn, w_ref[2], preferred_element_type=jnp.float32)
            return acc

        def batchnorm(h, g_ref, be_ref):
            # One-pass stats: row reduce (XLU) -> tiny matmul that reduces
            # over the W lane-groups AND re-tiles the per-channel result
            # across all W positions at once.  Normalize with a single FMA.
            s1 = jnp.sum(h, axis=0, keepdims=True)            # (1, WC)
            s2 = jnp.sum(h * h, axis=0, keepdims=True)        # (1, WC)
            mean = jnp.dot(s1, t_ref[...],
                           preferred_element_type=jnp.float32) * inv_cnt
            msq = jnp.dot(s2, t_ref[...],
                          preferred_element_type=jnp.float32) * inv_cnt
            var = msq - mean * mean                            # biased variance
            scale = g_ref[...] * jax.lax.rsqrt(var + BN_EPS)
            shift = be_ref[...] - mean * scale
            return h * scale + shift

        # conv1 -> bn1 -> selu   (conv bias omitted: exactly canceled by the
        #                         training-mode BN mean subtraction)
        h = _selu(batchnorm(conv(x, w1_ref), g1_ref, be1_ref))
        # conv2 -> bn2 -> +x -> selu
        h = batchnorm(conv(h, w2_ref), g2_ref, be2_ref) + x
        o_ref[...] = _selu(h)                                  # full-lane store

    return kernel


def resblock_pallas(x_nchw, w1, b1, g1, be1, w2, b2, g2, be2):
    """x_nchw: (N, C, H, W); conv weights in PyTorch OIHW layout."""
    del b1, b2  # exactly canceled by training-mode BN mean subtraction
    N, C, H, W = x_nchw.shape
    NH, WC = N * H, W * C

    # NCHW -> NHWC -> lane-dense (N*H, W*C).  (An NHWC end-to-end model would
    # drop this transpose; it is kept only to match the PyTorch interface.)
    x2d = jnp.transpose(x_nchw, (0, 2, 3, 1)).astype(jnp.float32).reshape(NH, WC)

    w1b = _banded_conv_weights(w1, W, C)
    w2b = _banded_conv_weights(w2, W, C)
    t_mat = jnp.kron(jnp.ones((W, W), jnp.float32),
                     jnp.eye(C, dtype=jnp.float32))            # (WC, WC)
    tile = lambda p: jnp.tile(p.astype(jnp.float32).reshape(1, C), (1, W))

    out2d = pl.pallas_call(
        _make_kernel(N, H, W, C),
        out_shape=jax.ShapeDtypeStruct((NH, WC), jnp.float32),
        in_specs=[pl.BlockSpec(memory_space=pltpu.MemorySpace.VMEM)] * 8,
        out_specs=pl.BlockSpec(memory_space=pltpu.MemorySpace.VMEM),
    )(x2d, w1b, w2b, t_mat, tile(g1), tile(be1), tile(g2), tile(be2))

    return jnp.transpose(out2d.reshape(N, H, W, C), (0, 3, 1, 2))  # -> NCHW


def resblock_ref(x, w1, b1, g1, be1, w2, b2, g2, be2):
    """Pure-JAX reference mirroring the PyTorch forward (NCHW, train-mode BN)."""
    def conv(h, w, b):
        y = jax.lax.conv_general_dilated(
            h, w, window_strides=(1, 1), padding=((1, 1), (1, 1)),
            dimension_numbers=('NCHW', 'OIHW', 'NCHW'))
        return y + b[None, :, None, None]

    def bn(h, g, be):
        mean = jnp.mean(h, axis=(0, 2, 3), keepdims=True)
        var = jnp.mean((h - mean) ** 2, axis=(0, 2, 3), keepdims=True)
        return ((h - mean) * jax.lax.rsqrt(var + BN_EPS)
                * g[None, :, None, None] + be[None, :, None, None])

    x_in = x
    h = _selu(bn(conv(x, w1, b1), g1, be1))
    h = bn(conv(h, w2, b2), g2, be2) + x_in
    return _selu(h)


if __name__ == "__main__":
    # Small shapes: batch=2, hidden_size=8 channels, 16x16 spatial (NCHW in).
    # W*C = 128 makes the in-kernel layout exactly one vreg wide per row.
    N, C, H, W = 2, 8, 16, 16
    key = jax.random.PRNGKey(0)
    kx, k1, k2, kb1, kb2, kg1, kg2, kbe1, kbe2 = jax.random.split(key, 9)

    x = jax.random.normal(kx, (N, C, H, W), jnp.float32)
    w1 = 0.1 * jax.random.normal(k1, (C, C, 3, 3), jnp.float32)   # OIHW
    w2 = 0.1 * jax.random.normal(k2, (C, C, 3, 3), jnp.float32)
    b1 = 0.1 * jax.random.normal(kb1, (C,), jnp.float32)
    b2 = 0.1 * jax.random.normal(kb2, (C,), jnp.float32)
    g1 = 1.0 + 0.1 * jax.random.normal(kg1, (C,), jnp.float32)    # BN gamma
    g2 = 1.0 + 0.1 * jax.random.normal(kg2, (C,), jnp.float32)
    be1 = 0.1 * jax.random.normal(kbe1, (C,), jnp.float32)        # BN beta
    be2 = 0.1 * jax.random.normal(kbe2, (C,), jnp.float32)

    out = resblock_pallas(x, w1, b1, g1, be1, w2, b2, g2, be2)
    out = jax.block_until_ready(out)

    ref = resblock_ref(x, w1, b1, g1, be1, w2, b2, g2, be2)
    assert out.shape == (N, C, H, W)
    err = float(jnp.max(jnp.abs(out - ref)))
    assert err < 2e-3, f"mismatch vs JAX reference: {err}"

    print("KERNEL_OK")
</pallas_src>

<mosaic_0001>
module attributes {stable_mosaic.version = 11 : i64} {
  func.func @kernel(%arg0: memref<32x128xf32, #tpu.memory_space<vmem>>, %arg1: memref<3x128x128xf32, #tpu.memory_space<vmem>>, %arg2: memref<3x128x128xf32, #tpu.memory_space<vmem>>, %arg3: memref<128x128xf32, #tpu.memory_space<vmem>>, %arg4: memref<1x128xf32, #tpu.memory_space<vmem>>, %arg5: memref<1x128xf32, #tpu.memory_space<vmem>>, %arg6: memref<1x128xf32, #tpu.memory_space<vmem>>, %arg7: memref<1x128xf32, #tpu.memory_space<vmem>>, %arg8: memref<32x128xf32, #tpu.memory_space<vmem>>) attributes {dimension_semantics = [], scalar_prefetch = 0 : i64, scratch_operands = 0 : i64, tpu.core_type = #tpu.core_type<tc>} {
    %c0 = arith.constant 0 : index
    %c0_0 = arith.constant 0 : index
    %0 = vector.load %arg0[%c0, %c0_0] : memref<32x128xf32, #tpu.memory_space<vmem>>, vector<32x128xf32>
    %1 = tpu.iota {dimensions = array<i32: 0>} : vector<32x128xi32>
    %c16_i32 = arith.constant 16 : i32
    %c0_i32 = arith.constant 0 : i32
    %2 = arith.cmpi eq, %c16_i32, %c0_i32 : i32
    %c1_i32 = arith.constant 1 : i32
    %3 = arith.select %2, %c1_i32, %c16_i32 : i32
    %4 = vector.broadcast %3 : i32 to vector<32x128xi32>
    %5 = arith.remsi %1, %4 : vector<32x128xi32>
    %c0_i32_1 = arith.constant 0 : i32
    %6 = vector.broadcast %c0_i32_1 : i32 to vector<32x128xi32>
    %7 = arith.cmpi ne, %5, %6 : vector<32x128xi32>
    %c0_i32_2 = arith.constant 0 : i32
    %8 = vector.broadcast %c0_i32_2 : i32 to vector<32x128xi32>
    %9 = arith.cmpi slt, %5, %8 : vector<32x128xi32>
    %c0_i32_3 = arith.constant 0 : i32
    %10 = arith.cmpi slt, %3, %c0_i32_3 : i32
    %11 = vector.broadcast %10 : i1 to vector<32x128xi1>
    %12 = vector.broadcast %11 : vector<32x128xi1> to vector<32x128xi1>
    %13 = arith.xori %9, %12 : vector<32x128xi1>
    %14 = arith.andi %13, %7 : vector<32x128xi1>
    %15 = vector.broadcast %3 : i32 to vector<32x128xi32>
    %16 = arith.addi %5, %15 : vector<32x128xi32>
    %17 = arith.select %14, %16, %5 : vector<32x128xi1>, vector<32x128xi32>
    %c0_i32_4 = arith.constant 0 : i32
    %18 = vector.broadcast %c0_i32_4 : i32 to vector<32x128xi32>
    %19 = arith.cmpi ne, %17, %18 : vector<32x128xi32>
    %c15_i32 = arith.constant 15 : i32
    %20 = vector.broadcast %c15_i32 : i32 to vector<32x128xi32>
    %21 = arith.cmpi ne, %17, %20 : vector<32x128xi32>
    %c1_i32_5 = arith.constant 1 : i32
    %22 = tpu.dynamic_rotate %0 by %c1_i32_5 dim 0 : vector<32x128xf32>, i32 -> vector<32x128xf32>
    %cst = arith.constant 0.000000e+00 : f32
    %23 = vector.broadcast %cst : f32 to vector<32x128xf32>
    %24 = arith.select %19, %22, %23 : vector<32x128xi1>, vector<32x128xf32>
    %c31_i32 = arith.constant 31 : i32
    %25 = tpu.dynamic_rotate %0 by %c31_i32 dim 0 : vector<32x128xf32>, i32 -> vector<32x128xf32>
    %cst_6 = arith.constant 0.000000e+00 : f32
    %26 = vector.broadcast %cst_6 : f32 to vector<32x128xf32>
    %27 = arith.select %21, %25, %26 : vector<32x128xi1>, vector<32x128xf32>
    %c0_7 = arith.constant 0 : index
    %c0_8 = arith.constant 0 : index
    %c0_9 = arith.constant 0 : index
    %28 = vector.load %arg1[%c0_7, %c0_8, %c0_9] : memref<3x128x128xf32, #tpu.memory_space<vmem>>, vector<1x128x128xf32>
    %29 = vector.shape_cast %28 : vector<1x128x128xf32> to vector<128x128xf32>
    %cst_10 = arith.constant dense<0.000000e+00> : vector<32x128xf32>
    %30 = tpu.matmul %24, %29, %cst_10 {dimension_numbers = #tpu.dot_dimension_numbers<[1], [0], [0], [1], [0, 0, 1, 1], [], []>} : vector<32x128xf32>, vector<128x128xf32>, vector<32x128xf32> -> vector<32x128xf32>
    %c1 = arith.constant 1 : index
    %c0_11 = arith.constant 0 : index
    %c0_12 = arith.constant 0 : index
    %31 = vector.load %arg1[%c1, %c0_11, %c0_12] : memref<3x128x128xf32, #tpu.memory_space<vmem>>, vector<1x128x128xf32>
    %32 = vector.shape_cast %31 : vector<1x128x128xf32> to vector<128x128xf32>
    %cst_13 = arith.constant dense<0.000000e+00> : vector<32x128xf32>
    %33 = tpu.matmul %0, %32, %cst_13 {dimension_numbers = #tpu.dot_dimension_numbers<[1], [0], [0], [1], [0, 0, 1, 1], [], []>} : vector<32x128xf32>, vector<128x128xf32>, vector<32x128xf32> -> vector<32x128xf32>
    %34 = arith.addf %30, %33 : vector<32x128xf32>
    %c2 = arith.constant 2 : index
    %c0_14 = arith.constant 0 : index
    %c0_15 = arith.constant 0 : index
    %35 = vector.load %arg1[%c2, %c0_14, %c0_15] : memref<3x128x128xf32, #tpu.memory_space<vmem>>, vector<1x128x128xf32>
    %36 = vector.shape_cast %35 : vector<1x128x128xf32> to vector<128x128xf32>
    %cst_16 = arith.constant dense<0.000000e+00> : vector<32x128xf32>
    %37 = tpu.matmul %27, %36, %cst_16 {dimension_numbers = #tpu.dot_dimension_numbers<[1], [0], [0], [1], [0, 0, 1, 1], [], []>} : vector<32x128xf32>, vector<128x128xf32>, vector<32x128xf32> -> vector<32x128xf32>
    %38 = arith.addf %34, %37 : vector<32x128xf32>
    %cst_17 = arith.constant dense<0.000000e+00> : vector<128xf32>
    %39 = vector.multi_reduction <add>, %38, %cst_17 [0] : vector<32x128xf32> to vector<128xf32>
    %40 = vector.shape_cast %39 : vector<128xf32> to vector<1x128xf32>
    %41 = arith.mulf %38, %38 : vector<32x128xf32>
    %cst_18 = arith.constant dense<0.000000e+00> : vector<128xf32>
    %42 = vector.multi_reduction <add>, %41, %cst_18 [0] : vector<32x128xf32> to vector<128xf32>
    %43 = vector.shape_cast %42 : vector<128xf32> to vector<1x128xf32>
    %c0_19 = arith.constant 0 : index
    %c0_20 = arith.constant 0 : index
    %44 = vector.load %arg3[%c0_19, %c0_20] : memref<128x128xf32, #tpu.memory_space<vmem>>, vector<128x128xf32>
    %cst_21 = arith.constant dense<0.000000e+00> : vector<1x128xf32>
    %45 = tpu.matmul %40, %44, %cst_21 {dimension_numbers = #tpu.dot_dimension_numbers<[1], [0], [0], [1], [0, 0, 1, 1], [], []>} : vector<1x128xf32>, vector<128x128xf32>, vector<1x128xf32> -> vector<1x128xf32>
    %cst_22 = arith.constant 0.001953125 : f32
    %46 = vector.broadcast %cst_22 : f32 to vector<1x128xf32>
    %47 = arith.mulf %45, %46 : vector<1x128xf32>
    %c0_23 = arith.constant 0 : index
    %c0_24 = arith.constant 0 : index
    %48 = vector.load %arg3[%c0_23, %c0_24] : memref<128x128xf32, #tpu.memory_space<vmem>>, vector<128x128xf32>
    %cst_25 = arith.constant dense<0.000000e+00> : vector<1x128xf32>
    %49 = tpu.matmul %43, %48, %cst_25 {dimension_numbers = #tpu.dot_dimension_numbers<[1], [0], [0], [1], [0, 0, 1, 1], [], []>} : vector<1x128xf32>, vector<128x128xf32>, vector<1x128xf32> -> vector<1x128xf32>
    %cst_26 = arith.constant 0.001953125 : f32
    %50 = vector.broadcast %cst_26 : f32 to vector<1x128xf32>
    %51 = arith.mulf %49, %50 : vector<1x128xf32>
    %52 = arith.mulf %47, %47 : vector<1x128xf32>
    %53 = arith.subf %51, %52 : vector<1x128xf32>
    %c0_27 = arith.constant 0 : index
    %c0_28 = arith.constant 0 : index
    %54 = vector.load %arg4[%c0_27, %c0_28] : memref<1x128xf32, #tpu.memory_space<vmem>>, vector<1x128xf32>
    %cst_29 = arith.constant 9.99999974E-6 : f32
    %55 = vector.broadcast %cst_29 : f32 to vector<1x128xf32>
    %56 = arith.addf %53, %55 : vector<1x128xf32>
    %57 = math.rsqrt %56 : vector<1x128xf32>
    %58 = arith.mulf %54, %57 : vector<1x128xf32>
    %c0_30 = arith.constant 0 : index
    %c0_31 = arith.constant 0 : index
    %59 = vector.load %arg5[%c0_30, %c0_31] : memref<1x128xf32, #tpu.memory_space<vmem>>, vector<1x128xf32>
    %60 = arith.mulf %47, %58 : vector<1x128xf32>
    %61 = arith.subf %59, %60 : vector<1x128xf32>
    %62 = vector.broadcast %58 : vector<1x128xf32> to vector<32x128xf32>
    %63 = arith.mulf %38, %62 : vector<32x128xf32>
    %64 = vector.broadcast %61 : vector<1x128xf32> to vector<32x128xf32>
    %65 = arith.addf %63, %64 : vector<32x128xf32>
    %cst_32 = arith.constant 0.000000e+00 : f32
    %66 = vector.broadcast %cst_32 : f32 to vector<32x128xf32>
    %67 = arith.cmpf ogt, %65, %66 : vector<32x128xf32>
    %68 = math.exp %65 : vector<32x128xf32>
    %cst_33 = arith.constant 1.000000e+00 : f32
    %69 = vector.broadcast %cst_33 : f32 to vector<32x128xf32>
    %70 = arith.subf %68, %69 : vector<32x128xf32>
    %cst_34 = arith.constant 1.67326319 : f32
    %71 = vector.broadcast %cst_34 : f32 to vector<32x128xf32>
    %72 = arith.mulf %71, %70 : vector<32x128xf32>
    %73 = arith.select %67, %65, %72 : vector<32x128xi1>, vector<32x128xf32>
    %cst_35 = arith.constant 1.05070102 : f32
    %74 = vector.broadcast %cst_35 : f32 to vector<32x128xf32>
    %75 = arith.mulf %74, %73 : vector<32x128xf32>
    %c1_i32_36 = arith.constant 1 : i32
    %76 = tpu.dynamic_rotate %75 by %c1_i32_36 dim 0 : vector<32x128xf32>, i32 -> vector<32x128xf32>
    %cst_37 = arith.constant 0.000000e+00 : f32
    %77 = vector.broadcast %cst_37 : f32 to vector<32x128xf32>
    %78 = arith.select %19, %76, %77 : vector<32x128xi1>, vector<32x128xf32>
    %c31_i32_38 = arith.constant 31 : i32
    %79 = tpu.dynamic_rotate %75 by %c31_i32_38 dim 0 : vector<32x128xf32>, i32 -> vector<32x128xf32>
    %cst_39 = arith.constant 0.000000e+00 : f32
    %80 = vector.broadcast %cst_39 : f32 to vector<32x128xf32>
    %81 = arith.select %21, %79, %80 : vector<32x128xi1>, vector<32x128xf32>
    %c0_40 = arith.constant 0 : index
    %c0_41 = arith.constant 0 : index
    %c0_42 = arith.constant 0 : index
    %82 = vector.load %arg2[%c0_40, %c0_41, %c0_42] : memref<3x128x128xf32, #tpu.memory_space<vmem>>, vector<1x128x128xf32>
    %83 = vector.shape_cast %82 : vector<1x128x128xf32> to vector<128x128xf32>
    %cst_43 = arith.constant dense<0.000000e+00> : vector<32x128xf32>
    %84 = tpu.matmul %78, %83, %cst_43 {dimension_numbers = #tpu.dot_dimension_numbers<[1], [0], [0], [1], [0, 0, 1, 1], [], []>} : vector<32x128xf32>, vector<128x128xf32>, vector<32x128xf32> -> vector<32x128xf32>
    %c1_44 = arith.constant 1 : index
    %c0_45 = arith.constant 0 : index
    %c0_46 = arith.constant 0 : index
    %85 = vector.load %arg2[%c1_44, %c0_45, %c0_46] : memref<3x128x128xf32, #tpu.memory_space<vmem>>, vector<1x128x128xf32>
    %86 = vector.shape_cast %85 : vector<1x128x128xf32> to vector<128x128xf32>
    %cst_47 = arith.constant dense<0.000000e+00> : vector<32x128xf32>
    %87 = tpu.matmul %75, %86, %cst_47 {dimension_numbers = #tpu.dot_dimension_numbers<[1], [0], [0], [1], [0, 0, 1, 1], [], []>} : vector<32x128xf32>, vector<128x128xf32>, vector<32x128xf32> -> vector<32x128xf32>
    %88 = arith.addf %84, %87 : vector<32x128xf32>
    %c2_48 = arith.constant 2 : index
    %c0_49 = arith.constant 0 : index
    %c0_50 = arith.constant 0 : index
    %89 = vector.load %arg2[%c2_48, %c0_49, %c0_50] : memref<3x128x128xf32, #tpu.memory_space<vmem>>, vector<1x128x128xf32>
    %90 = vector.shape_cast %89 : vector<1x128x128xf32> to vector<128x128xf32>
    %cst_51 = arith.constant dense<0.000000e+00> : vector<32x128xf32>
    %91 = tpu.matmul %81, %90, %cst_51 {dimension_numbers = #tpu.dot_dimension_numbers<[1], [0], [0], [1], [0, 0, 1, 1], [], []>} : vector<32x128xf32>, vector<128x128xf32>, vector<32x128xf32> -> vector<32x128xf32>
    %92 = arith.addf %88, %91 : vector<32x128xf32>
    %cst_52 = arith.constant dense<0.000000e+00> : vector<128xf32>
    %93 = vector.multi_reduction <add>, %92, %cst_52 [0] : vector<32x128xf32> to vector<128xf32>
    %94 = vector.shape_cast %93 : vector<128xf32> to vector<1x128xf32>
    %95 = arith.mulf %92, %92 : vector<32x128xf32>
    %cst_53 = arith.constant dense<0.000000e+00> : vector<128xf32>
    %96 = vector.multi_reduction <add>, %95, %cst_53 [0] : vector<32x128xf32> to vector<128xf32>
    %97 = vector.shape_cast %96 : vector<128xf32> to vector<1x128xf32>
    %c0_54 = arith.constant 0 : index
    %c0_55 = arith.constant 0 : index
    %98 = vector.load %arg3[%c0_54, %c0_55] : memref<128x128xf32, #tpu.memory_space<vmem>>, vector<128x128xf32>
    %cst_56 = arith.constant dense<0.000000e+00> : vector<1x128xf32>
    %99 = tpu.matmul %94, %98, %cst_56 {dimension_numbers = #tpu.dot_dimension_numbers<[1], [0], [0], [1], [0, 0, 1, 1], [], []>} : vector<1x128xf32>, vector<128x128xf32>, vector<1x128xf32> -> vector<1x128xf32>
    %cst_57 = arith.constant 0.001953125 : f32
    %100 = vector.broadcast %cst_57 : f32 to vector<1x128xf32>
    %101 = arith.mulf %99, %100 : vector<1x128xf32>
    %c0_58 = arith.constant 0 : index
    %c0_59 = arith.constant 0 : index
    %102 = vector.load %arg3[%c0_58, %c0_59] : memref<128x128xf32, #tpu.memory_space<vmem>>, vector<128x128xf32>
    %cst_60 = arith.constant dense<0.000000e+00> : vector<1x128xf32>
    %103 = tpu.matmul %97, %102, %cst_60 {dimension_numbers = #tpu.dot_dimension_numbers<[1], [0], [0], [1], [0, 0, 1, 1], [], []>} : vector<1x128xf32>, vector<128x128xf32>, vector<1x128xf32> -> vector<1x128xf32>
    %cst_61 = arith.constant 0.001953125 : f32
    %104 = vector.broadcast %cst_61 : f32 to vector<1x128xf32>
    %105 = arith.mulf %103, %104 : vector<1x128xf32>
    %106 = arith.mulf %101, %101 : vector<1x128xf32>
    %107 = arith.subf %105, %106 : vector<1x128xf32>
    %c0_62 = arith.constant 0 : index
    %c0_63 = arith.constant 0 : index
    %108 = vector.load %arg6[%c0_62, %c0_63] : memref<1x128xf32, #tpu.memory_space<vmem>>, vector<1x128xf32>
    %cst_64 = arith.constant 9.99999974E-6 : f32
    %109 = vector.broadcast %cst_64 : f32 to vector<1x128xf32>
    %110 = arith.addf %107, %109 : vector<1x128xf32>
    %111 = math.rsqrt %110 : vector<1x128xf32>
    %112 = arith.mulf %108, %111 : vector<1x128xf32>
    %c0_65 = arith.constant 0 : index
    %c0_66 = arith.constant 0 : index
    %113 = vector.load %arg7[%c0_65, %c0_66] : memref<1x128xf32, #tpu.memory_space<vmem>>, vector<1x128xf32>
    %114 = arith.mulf %101, %112 : vector<1x128xf32>
    %115 = arith.subf %113, %114 : vector<1x128xf32>
    %116 = vector.broadcast %112 : vector<1x128xf32> to vector<32x128xf32>
    %117 = arith.mulf %92, %116 : vector<32x128xf32>
    %118 = vector.broadcast %115 : vector<1x128xf32> to vector<32x128xf32>
    %119 = arith.addf %117, %118 : vector<32x128xf32>
    %120 = arith.addf %119, %0 : vector<32x128xf32>
    %cst_67 = arith.constant 0.000000e+00 : f32
    %121 = vector.broadcast %cst_67 : f32 to vector<32x128xf32>
    %122 = arith.cmpf ogt, %120, %121 : vector<32x128xf32>
    %123 = math.exp %120 : vector<32x128xf32>
    %cst_68 = arith.constant 1.000000e+00 : f32
    %124 = vector.broadcast %cst_68 : f32 to vector<32x128xf32>
    %125 = arith.subf %123, %124 : vector<32x128xf32>
    %cst_69 = arith.constant 1.67326319 : f32
    %126 = vector.broadcast %cst_69 : f32 to vector<32x128xf32>
    %127 = arith.mulf %126, %125 : vector<32x128xf32>
    %128 = arith.select %122, %120, %127 : vector<32x128xi1>, vector<32x128xf32>
    %cst_70 = arith.constant 1.05070102 : f32
    %129 = vector.broadcast %cst_70 : f32 to vector<32x128xf32>
    %130 = arith.mulf %129, %128 : vector<32x128xf32>
    %c0_71 = arith.constant 0 : index
    %c0_72 = arith.constant 0 : index
    %131 = vector.load %arg8[%c0_71, %c0_72] : memref<32x128xf32, #tpu.memory_space<vmem>>, vector<32x128xf32>
    tpu.vector_store %arg8[%c0_71, %c0_72], %130 {strides = array<i32>} : memref<32x128xf32, #tpu.memory_space<vmem>>, vector<32x128xf32>,
    return
  }
}

</mosaic_0001>

<llo_original>
// kernel: tpu_custom_call.1
$region0: #{tpu_custom_call.1}
  #allocation0 [shape = 'u32[]', space=smem, size = 0x4, offset = 0x4, fixed_abs, tag = 'smem constant byte address 0x4 - core index']
  #allocation1 [shape = 'u32[144,128]{1,0:T(1,128)}', space=vmem, size = 0x12000, scoped, tag = 'internal scratch']
  %s0 = inlined_call_operand.hbm [shape: f32[32,128], index: 0, kind: input, shape index: {}]
  %s1 = inlined_call_operand.hbm [shape: f32[3,128,128], index: 1, kind: input, shape index: {}]
  %s2 = inlined_call_operand.hbm [shape: f32[3,128,128], index: 2, kind: input, shape index: {}]
  %s3 = inlined_call_operand.hbm [shape: f32[128,128], index: 3, kind: input, shape index: {}]
  %s4 = inlined_call_operand.vmem [shape: f32[1,128], index: 4, kind: input, shape index: {}]
  %s5 = inlined_call_operand.vmem [shape: f32[1,128], index: 5, kind: input, shape index: {}]
  %s6 = inlined_call_operand.vmem [shape: f32[1,128], index: 6, kind: input, shape index: {}]
  %s7 = inlined_call_operand.vmem [shape: f32[1,128], index: 7, kind: input, shape index: {}]
  %s8 = inlined_call_operand.hbm [shape: f32[32,128], index: 8, kind: output, shape index: {}]
  %s9 = sld [smem:[#allocation0]]
  $region58: #{tpu_custom_call.1} parent=0
    _
  %s11 = ssub.s32 1, %s9
  %s12 = scalar_select 0, %s11, %s9
  $region1: #{tpu_custom_call.1} parent=0
    #allocation2 [shape = 'u8[16384]{0}', space=vmem, size = 0x4000, scoped, tag = 'input window, operand 0, single buffered']
    #allocation3 [shape = 's32[1]{0}', space=sflag, size = 0x4, scoped, tag = 'scoped memory for tpu_custom_call.1']
    #allocation4 [shape = 's32[1]{0}', space=sflag, size = 0x4, scoped, tag = 'scoped memory for tpu_custom_call.1']
    #allocation5 [shape = 'u8[196608]{0}', space=vmem, size = 0x30000, scoped, tag = 'input window, operand 1, single buffered']
    #allocation6 [shape = 's32[1]{0}', space=sflag, size = 0x4, scoped, tag = 'scoped memory for tpu_custom_call.1']
    #allocation7 [shape = 'u8[196608]{0}', space=vmem, size = 0x30000, scoped, tag = 'input window, operand 2, single buffered']
    #allocation8 [shape = 'u8[65536]{0}', space=vmem, size = 0x10000, scoped, tag = 'input window, operand 3, single buffered']
    #allocation9 [shape = 's32[1]{0}', space=sflag, size = 0x4, scoped, tag = 'scoped memory for tpu_custom_call.1']
    #allocation10 [shape = 'u8[16384]{0}', space=vmem, size = 0x4000, scoped, tag = 'output window, operand 0, single buffered']
    %13 = vsyncpa [#allocation3], 0
    %14 = vsyncpa [#allocation6], 0
    %15 = vsyncpa [#allocation9], 0
    %16 = vsyncpa [#allocation4], 0
    // Predicated region
    $region2: #{tpu_custom_call.1} parent=1 // pred_check
      _
    $region3: #{tpu_custom_call.1} parent=1 // pred_check_branch
      %18 = sbr.rel (0) target = $region5
    $region4: #{tpu_custom_call.1} parent=1 // pred_region
      %s20 = ssub.s32 512, 512
      %21 = vsyncadd [#allocation3], %s20
      %s22 = sshll.u32 [#allocation2], 4
      %s23 = int_to_ptr.vmem [resolvable:$true] %s22
      %28 = dma.hbm_to_vmem [thread:$0]  %s0, 512, %s23, [#allocation3], 128, 128, 8
    $region5: #{tpu_custom_call.1} parent=1 // pred_fallthru
      _
    // Predicated region
    $region6: #{tpu_custom_call.1} parent=1 // pred_check
      _
    $region7: #{tpu_custom_call.1} parent=1 // pred_check_branch
      %30 = sbr.rel (0) target = $region9
    $region8: #{tpu_custom_call.1} parent=1 // pred_region
      %s32 = ssub.s32 6144, 6144
      %33 = vsyncadd [#allocation6], %s32
      %s34 = sshll.u32 [#allocation5], 4
      %s35 = int_to_ptr.vmem [resolvable:$true] %s34
      %40 = dma.hbm_to_vmem [thread:$0]  %s1, 6144, %s35, [#allocation6], 128, 128, 8
    $region9: #{tpu_custom_call.1} parent=1 // pred_fallthru
      _
    // Predicated region
    $region10: #{tpu_custom_call.1} parent=1 // pred_check
      _
    $region11: #{tpu_custom_call.1} parent=1 // pred_check_branch
      %42 = sbr.rel (0) target = $region13
    $region12: #{tpu_custom_call.1} parent=1 // pred_region
      %s44 = ssub.s32 6144, 6144
      %45 = vsyncadd [#allocation6], %s44
      %s46 = sshll.u32 [#allocation7], 4
      %s47 = int_to_ptr.vmem [resolvable:$true] %s46
      %52 = dma.hbm_to_vmem [thread:$0]  %s2, 6144, %s47, [#allocation6], 128, 128, 8
    $region13: #{tpu_custom_call.1} parent=1 // pred_fallthru
      _
    // Predicated region
    $region14: #{tpu_custom_call.1} parent=1 // pred_check
      _
    $region15: #{tpu_custom_call.1} parent=1 // pred_check_branch
      %54 = sbr.rel (0) target = $region17
    $region16: #{tpu_custom_call.1} parent=1 // pred_region
      %s56 = ssub.s32 2048, 2048
      %57 = vsyncadd [#allocation9], %s56
      %s58 = sshll.u32 [#allocation8], 4
      %s59 = int_to_ptr.vmem [resolvable:$true] %s58
      %64 = dma.hbm_to_vmem [thread:$0]  %s3, 2048, %s59, [#allocation9], 128, 128, 8
    $region17: #{tpu_custom_call.1} parent=1 // pred_fallthru
      _
    // Predicated region
    $region18: #{tpu_custom_call.1} parent=1 // pred_check
      _
    $region19: #{tpu_custom_call.1} parent=1 // pred_check_branch
      %66 = sbr.rel (0) target = $region21
    $region20: #{tpu_custom_call.1} parent=1 // pred_region
      _
    $region21: #{tpu_custom_call.1} parent=1 // pred_fallthru
      _
    // Predicated region
    $region22: #{tpu_custom_call.1} parent=1 // pred_check
      _
    $region23: #{tpu_custom_call.1} parent=1 // pred_check_branch
      %68 = sbr.rel (0) target = $region25
    $region24: #{tpu_custom_call.1} parent=1 // pred_region
      _
    $region25: #{tpu_custom_call.1} parent=1 // pred_fallthru
      _
    // Predicated region
    $region26: #{tpu_custom_call.1} parent=1 // pred_check
      _
    $region27: #{tpu_custom_call.1} parent=1 // pred_check_branch
      %70 = sbr.rel (0) target = $region29
    $region28: #{tpu_custom_call.1} parent=1 // pred_region
      _
    $region29: #{tpu_custom_call.1} parent=1 // pred_fallthru
      _
    // Predicated region
    $region30: #{tpu_custom_call.1} parent=1 // pred_check
      _
    $region31: #{tpu_custom_call.1} parent=1 // pred_check_branch
      %72 = sbr.rel (0) target = $region33
    $region32: #{tpu_custom_call.1} parent=1 // pred_region
      _
    $region33: #{tpu_custom_call.1} parent=1 // pred_fallthru
      _
    // Predicated region
    $region34: #{tpu_custom_call.1} parent=1 // pred_check
      _
    $region35: #{tpu_custom_call.1} parent=1 // pred_check_branch
      %74 = sbr.rel (0) target = $region37
    $region36: #{tpu_custom_call.1} parent=1 // pred_region
      %75 = dma.done [#allocation3], 512
    $region37: #{tpu_custom_call.1} parent=1 // pred_fallthru
      _
    // Predicated region
    $region38: #{tpu_custom_call.1} parent=1 // pred_check
      _
    $region39: #{tpu_custom_call.1} parent=1 // pred_check_branch
      %77 = sbr.rel (0) target = $region41
    $region40: #{tpu_custom_call.1} parent=1 // pred_region
      %78 = dma.done [#allocation6], 6144
    $region41: #{tpu_custom_call.1} parent=1 // pred_fallthru
      _
    // Predicated region
    $region42: #{tpu_custom_call.1} parent=1 // pred_check
      _
    $region43: #{tpu_custom_call.1} parent=1 // pred_check_branch
      %80 = sbr.rel (0) target = $region45
    $region44: #{tpu_custom_call.1} parent=1 // pred_region
      %81 = dma.done [#allocation6], 6144
    $region45: #{tpu_custom_call.1} parent=1 // pred_fallthru
      _
    // Predicated region
    $region46: #{tpu_custom_call.1} parent=1 // pred_check
      _
    $region47: #{tpu_custom_call.1} parent=1 // pred_check_branch
      %83 = sbr.rel (0) target = $region49
    $region48: #{tpu_custom_call.1} parent=1 // pred_region
      %84 = dma.done [#allocation9], 2048
    $region49: #{tpu_custom_call.1} parent=1 // pred_fallthru
      _
    %v85 = vld [vmem:[#allocation2] sm:$0xff]
    %v86 = vld [vmem:[#allocation2 + $0x8] sm:$0xff]
    %v87 = vld [vmem:[#allocation2 + $0x10] sm:$0xff]
    %v88 = vld [vmem:[#allocation2 + $0x18] sm:$0xff]
    %v89 = vlaneseq
    %v90 = vshrl.u32 %v89, 7
    %v91 = vadd.s32 %v90, 8
    %v92 = vadd.s32 %v90, 16
    %v93 = vadd.s32 %v90, 24
    %vm94 = vcmp.lt.s32.totalorder %v90, 0
    %v95 = vsub.s32 0, %v90
    %v96 = vsel %vm94, %v95, %v90
    %v97 = vshrl.u32 %v96, 4
    %v98 = vand.u32 %v96, 15
    %v99 = vsub.s32 0, %v98
    %v100 = vsel %vm94, %v99, %v98
    %vm101 = vcmp.lt.s32.totalorder %v91, 0
    %v102 = vsub.s32 0, %v91
    %v103 = vsel %vm101, %v102, %v91
    %v104 = vshrl.u32 %v103, 4
    %v105 = vand.u32 %v103, 15
    %v106 = vsub.s32 0, %v105
    %v107 = vsel %vm101, %v106, %v105
    %vm108 = vcmp.lt.s32.totalorder %v92, 0
    %v109 = vsub.s32 0, %v92
    %v110 = vsel %vm108, %v109, %v92
    %v111 = vshrl.u32 %v110, 4
    %v112 = vand.u32 %v110, 15
    %v113 = vsub.s32 0, %v112
    %v114 = vsel %vm108, %v113, %v112
    %vm115 = vcmp.lt.s32.totalorder %v93, 0
    %v116 = vsub.s32 0, %v93
    %v117 = vsel %vm115, %v116, %v93
    %v118 = vshrl.u32 %v117, 4
    %v119 = vand.u32 %v117, 15
    %v120 = vsub.s32 0, %v119
    %v121 = vsel %vm115, %v120, %v119
    %vm122 = vcmp.ne.s32.totalorder %v100, 0
    %vm123 = vcmp.ne.s32.totalorder %v107, 0
    %vm124 = vcmp.ne.s32.totalorder %v114, 0
    %vm125 = vcmp.ne.s32.totalorder %v121, 0
    %vm126 = vcmp.lt.s32.totalorder %v100, 0
    %vm127 = vcmp.lt.s32.totalorder %v107, 0
    %vm128 = vcmp.lt.s32.totalorder %v114, 0
    %vm129 = vcmp.lt.s32.totalorder %v121, 0
    %vm130 = vmand %vm126, %vm122
    %vm131 = vmand %vm127, %vm123
    %vm132 = vmand %vm128, %vm124
    %vm133 = vmand %vm129, %vm125
    %v134 = vadd.s32 %v100, 16
    %v135 = vadd.s32 %v107, 16
    %v136 = vadd.s32 %v114, 16
    %v137 = vadd.s32 %v121, 16
    %v138 = vsel %vm130, %v134, %v100
    %v139 = vsel %vm131, %v135, %v107
    %v140 = vsel %vm132, %v136, %v114
    %v141 = vsel %vm133, %v137, %v121
    %vm142 = vcmp.ne.s32.totalorder %v138, 0
    %vm143 = vcmp.ne.s32.totalorder %v139, 0
    %vm144 = vcmp.ne.s32.totalorder %v140, 0
    %vm145 = vcmp.ne.s32.totalorder %v141, 0
    %vm146 = vcmp.ne.s32.totalorder %v138, 15
    %vm147 = vcmp.ne.s32.totalorder %v139, 15
    %vm148 = vcmp.ne.s32.totalorder %v140, 15
    %vm149 = vcmp.ne.s32.totalorder %v141, 15
    %v150 = vrot.slane %v85, 7
    %v151 = vrot.slane %v86, 7
    %v152 = vrot.slane %v87, 7
    %v153 = vrot.slane %v88, 7
    %vm154 = vcmp.lt.s32.totalorder %v90, 1
    %v155 = vsel %vm154, %v152, %v153
    %v156 = vsel %vm154, %v151, %v152
    %v157 = vsel %vm154, %v150, %v151
    %v158 = vsel %vm154, %v153, %v150
    %v159 = vsel %vm142, %v158, 0.0
    %v160 = vsel %vm143, %v157, 0.0
    %v161 = vsel %vm144, %v156, 0.0
    %v162 = vsel %vm145, %v155, 0.0
    %v163 = vrot.slane %v85, 1
    %v164 = vrot.slane %v86, 1
    %v165 = vrot.slane %v87, 1
    %v166 = vrot.slane %v88, 1
    %vm167 = vcmp.lt.s32.totalorder %v90, 7
    %v168 = vsel %vm167, %v165, %v166
    %v169 = vsel %vm167, %v164, %v165
    %v170 = vsel %vm167, %v163, %v164
    %v171 = vsel %vm167, %v166, %v163
    %v172 = vsel %vm146, %v170, 0.0
    %v173 = vsel %vm147, %v169, 0.0
    %v174 = vsel %vm148, %v168, 0.0
    %v175 = vsel %vm149, %v171, 0.0
    %v176 = vld [vmem:[#allocation5] sm:$0xff]
    %v177 = vld [vmem:[#allocation5 + $0x8] sm:$0xff]
    %v178 = vld [vmem:[#allocation5 + $0x10] sm:$0xff]
    %v179 = vld [vmem:[#allocation5 + $0x18] sm:$0xff]
    %v180 = vld [vmem:[#allocation5 + $0x20] sm:$0xff]
    %v181 = vld [vmem:[#allocation5 + $0x28] sm:$0xff]
    %v182 = vld [vmem:[#allocation5 + $0x30] sm:$0xff]
    %v183 = vld [vmem:[#allocation5 + $0x38] sm:$0xff]
    %v184 = vld [vmem:[#allocation5 + $0x40] sm:$0xff]
    %v185 = vld [vmem:[#allocation5 + $0x48] sm:$0xff]
    %v186 = vld [vmem:[#allocation5 + $0x50] sm:$0xff]
    %v187 = vld [vmem:[#allocation5 + $0x58] sm:$0xff]
    %v188 = vld [vmem:[#allocation5 + $0x60] sm:$0xff]
    %v189 = vld [vmem:[#allocation5 + $0x68] sm:$0xff]
    %v190 = vld [vmem:[#allocation5 + $0x70] sm:$0xff]
    %v191 = vld [vmem:[#allocation5 + $0x78] sm:$0xff]
    %s192 = scalar_lea.vmem [#allocation5], 128
    %v193 = vld [vmem:[%s192] sm:$0xff]
    %v194 = vld [vmem:[%s192 + $0x8] sm:$0xff]
    %v195 = vld [vmem:[%s192 + $0x10] sm:$0xff]
    %v196 = vld [vmem:[%s192 + $0x18] sm:$0xff]
    %v197 = vld [vmem:[%s192 + $0x20] sm:$0xff]
    %v198 = vld [vmem:[%s192 + $0x28] sm:$0xff]
    %v199 = vld [vmem:[%s192 + $0x30] sm:$0xff]
    %v200 = vld [vmem:[%s192 + $0x38] sm:$0xff]
    %v201 = vld [vmem:[%s192 + $0x40] sm:$0xff]
    %v202 = vld [vmem:[%s192 + $0x48] sm:$0xff]
    %v203 = vld [vmem:[%s192 + $0x50] sm:$0xff]
    %v204 = vld [vmem:[%s192 + $0x58] sm:$0xff]
    %v205 = vld [vmem:[%s192 + $0x60] sm:$0xff]
    %v206 = vld [vmem:[%s192 + $0x68] sm:$0xff]
    %v207 = vld [vmem:[%s192 + $0x70] sm:$0xff]
    %v208 = vld [vmem:[%s192 + $0x78] sm:$0xff]
    %209 = vmatprep.subr.mxu0 0.0
    %210 = vmatpush1.msra.mxu0 %v193
    %211 = vmatprep.subr.mxu0 0.0
    %212 = vmatpush1.msra.mxu0 %v194
    %213 = vmatprep.subr.mxu0 0.0
    %214 = vmatpush1.msra.mxu0 %v195
    %215 = vmatprep.subr.mxu0 0.0
    %216 = vmatpush1.msra.mxu0 %v196
    %217 = vmatprep.subr.mxu0 0.0
    %218 = vmatpush1.msra.mxu0 %v197
    %219 = vmatprep.subr.mxu0 0.0
    %220 = vmatpush1.msra.mxu0 %v198
    %221 = vmatprep.subr.mxu0 0.0
    %222 = vmatpush1.msra.mxu0 %v199
    %223 = vmatprep.subr.mxu0 0.0
    %224 = vmatpush1.msra.mxu0 %v200
    %225 = vmatprep.subr.mxu0 0.0
    %226 = vmatpush1.msra.mxu0 %v201
    %227 = vmatprep.subr.mxu0 0.0
    %228 = vmatpush1.msra.mxu0 %v202
    %229 = vmatprep.subr.mxu0 0.0
    %230 = vmatpush1.msra.mxu0 %v203
    %231 = vmatprep.subr.mxu0 0.0
    %232 = vmatpush1.msra.mxu0 %v204
    %233 = vmatprep.subr.mxu0 0.0
    %234 = vmatpush1.msra.mxu0 %v205
    %235 = vmatprep.subr.mxu0 0.0
    %236 = vmatpush1.msra.mxu0 %v206
    %237 = vmatprep.subr.mxu0 0.0
    %238 = vmatpush1.msra.mxu0 %v207
    %239 = vmatprep.subr.mxu0 0.0
    %240 = vmatpush1.msra.mxu0 %v208
    %241 = vmatprep.subr.mxu0 0.0
    %242 = vmatpush1.msra.mxu0 0.0
    %243 = vmatprep.subr.mxu0 0.0
    %244 = vmatpush1.msra.mxu0 0.0
    %245 = vmatprep.subr.mxu0 0.0
    %246 = vmatpush1.msra.mxu0 0.0
    %247 = vmatprep.subr.mxu0 0.0
    %248 = vmatpush1.msra.mxu0 0.0
    %249 = vmatprep.subr.mxu0 0.0
    %250 = vmatpush1.msra.mxu0 0.0
    %251 = vmatprep.subr.mxu0 0.0
    %252 = vmatpush1.msra.mxu0 0.0
    %253 = vmatprep.subr.mxu0 0.0
    %254 = vmatpush1.msra.mxu0 0.0
    %255 = vmatprep.subr.mxu0 0.0
    %256 = vmatpush1.msra.mxu0 0.0
    %257 = vmatprep.subr.mxu0 0.0
    %258 = vmatpush1.msra.mxu0 0.0
    %259 = vmatprep.subr.mxu0 0.0
    %260 = vmatpush1.msra.mxu0 0.0
    %261 = vmatprep.subr.mxu0 0.0
    %262 = vmatpush1.msra.mxu0 0.0
    %263 = vmatprep.subr.mxu0 0.0
    %264 = vmatpush1.msra.mxu0 0.0
    %265 = vmatprep.subr.mxu0 0.0
    %266 = vmatpush1.msra.mxu0 0.0
    %267 = vmatprep.subr.mxu0 0.0
    %268 = vmatpush1.msra.mxu0 0.0
    %269 = vmatprep.subr.mxu0 0.0
    %270 = vmatpush1.msra.mxu0 0.0
    %271 = vmatprep.subr.mxu0 0.0
    %272 = vmatpush1.msra.mxu0 0.0
    %273 = vmatprep.mubr.f32.mxu0 0.0
    %274 = vmatmul.mubr.f32.gmra.mrb[0].mxu0 %v85
    %v275 = vpop.f32.mrb[0].mxu0
    %v276 = vadd.f32 0.0, %v275
    %v277 = vpop.f32.mrb[0].mxu0
    %278 = vmatprep.mubr.f32.mxu0 0.0
    %279 = vmatmul.mubr.f32.gmra.mrb[0].mxu0 %v86
    %v280 = vpop.f32.mrb[0].mxu0
    %v281 = vadd.f32 0.0, %v280
    %v282 = vpop.f32.mrb[0].mxu0
    %283 = vmatprep.mubr.f32.mxu0 0.0
    %284 = vmatmul.mubr.f32.gmra.mrb[0].mxu0 %v87
    %v285 = vpop.f32.mrb[0].mxu0
    %v286 = vadd.f32 0.0, %v285
    %v287 = vpop.f32.mrb[0].mxu0
    %288 = vmatprep.mubr.f32.mxu0 0.0
    %289 = vmatmul.mubr.f32.gmra.mrb[0].mxu0 %v88
    %v290 = vpop.f32.mrb[0].mxu0
    %v291 = vadd.f32 0.0, %v290
    %v292 = vpop.f32.mrb[0].mxu0
    %293 = vdwg.mxu0
    %294 = vmatprep.subr.mxu0 0.0
    %295 = vmatpush1.msra.mxu0 %v176
    %296 = vmatprep.subr.mxu0 0.0
    %297 = vmatpush1.msra.mxu0 %v177
    %298 = vmatprep.subr.mxu0 0.0
    %299 = vmatpush1.msra.mxu0 %v178
    %300 = vmatprep.subr.mxu0 0.0
    %301 = vmatpush1.msra.mxu0 %v179
    %302 = vmatprep.subr.mxu0 0.0
    %303 = vmatpush1.msra.mxu0 %v180
    %304 = vmatprep.subr.mxu0 0.0
    %305 = vmatpush1.msra.mxu0 %v181
    %306 = vmatprep.subr.mxu0 0.0
    %307 = vmatpush1.msra.mxu0 %v182
    %308 = vmatprep.subr.mxu0 0.0
    %309 = vmatpush1.msra.mxu0 %v183
    %310 = vmatprep.subr.mxu0 0.0
    %311 = vmatpush1.msra.mxu0 %v184
    %312 = vmatprep.subr.mxu0 0.0
    %313 = vmatpush1.msra.mxu0 %v185
    %314 = vmatprep.subr.mxu0 0.0
    %315 = vmatpush1.msra.mxu0 %v186
    %316 = vmatprep.subr.mxu0 0.0
    %317 = vmatpush1.msra.mxu0 %v187
    %318 = vmatprep.subr.mxu0 0.0
    %319 = vmatpush1.msra.mxu0 %v188
    %320 = vmatprep.subr.mxu0 0.0
    %321 = vmatpush1.msra.mxu0 %v189
    %322 = vmatprep.subr.mxu0 0.0
    %323 = vmatpush1.msra.mxu0 %v190
    %324 = vmatprep.subr.mxu0 0.0
    %325 = vmatpush1.msra.mxu0 %v191
    %326 = vmatprep.subr.mxu0 0.0
    %327 = vmatpush1.msra.mxu0 0.0
    %328 = vmatprep.subr.mxu0 0.0
    %329 = vmatpush1.msra.mxu0 0.0
    %330 = vmatprep.subr.mxu0 0.0
    %331 = vmatpush1.msra.mxu0 0.0
    %332 = vmatprep.subr.mxu0 0.0
    %333 = vmatpush1.msra.mxu0 0.0
    %334 = vmatprep.subr.mxu0 0.0
    %335 = vmatpush1.msra.mxu0 0.0
    %336 = vmatprep.subr.mxu0 0.0
    %337 = vmatpush1.msra.mxu0 0.0
    %338 = vmatprep.subr.mxu0 0.0
    %339 = vmatpush1.msra.mxu0 0.0
    %340 = vmatprep.subr.mxu0 0.0
    %341 = vmatpush1.msra.mxu0 0.0
    %342 = vmatprep.subr.mxu0 0.0
    %343 = vmatpush1.msra.mxu0 0.0
    %344 = vmatprep.subr.mxu0 0.0
    %345 = vmatpush1.msra.mxu0 0.0
    %346 = vmatprep.subr.mxu0 0.0
    %347 = vmatpush1.msra.mxu0 0.0
    %348 = vmatprep.subr.mxu0 0.0
    %349 = vmatpush1.msra.mxu0 0.0
    %350 = vmatprep.subr.mxu0 0.0
    %351 = vmatpush1.msra.mxu0 0.0
    %352 = vmatprep.subr.mxu0 0.0
    %353 = vmatpush1.msra.mxu0 0.0
    %354 = vmatprep.subr.mxu0 0.0
    %355 = vmatpush1.msra.mxu0 0.0
    %356 = vmatprep.subr.mxu0 0.0
    %357 = vmatpush1.msra.mxu0 0.0
    %358 = vmatprep.mubr.f32.mxu0 0.0
    %359 = vmatmul.mubr.f32.gmra.mrb[0].mxu0 %v159
    %v360 = vpop.f32.mrb[0].mxu0
    %v361 = vadd.f32 %v276, %v360
    %v362 = vpop.f32.mrb[0].mxu0
    %363 = vmatprep.mubr.f32.mxu0 0.0
    %364 = vmatmul.mubr.f32.gmra.mrb[0].mxu0 %v160
    %v365 = vpop.f32.mrb[0].mxu0
    %v366 = vadd.f32 %v281, %v365
    %v367 = vpop.f32.mrb[0].mxu0
    %368 = vmatprep.mubr.f32.mxu0 0.0
    %369 = vmatmul.mubr.f32.gmra.mrb[0].mxu0 %v161
    %v370 = vpop.f32.mrb[0].mxu0
    %v371 = vadd.f32 %v286, %v370
    %v372 = vpop.f32.mrb[0].mxu0
    %373 = vmatprep.mubr.f32.mxu0 0.0
    %374 = vmatmul.mubr.f32.gmra.mrb[0].mxu0 %v162
    %v375 = vpop.f32.mrb[0].mxu0
    %v376 = vadd.f32 %v291, %v375
    %v377 = vpop.f32.mrb[0].mxu0
    %378 = vdwg.mxu0
    %s379 = scalar_lea.vmem [#allocation5], 256
    %v380 = vld [vmem:[%s379] sm:$0xff]
    %v381 = vld [vmem:[%s379 + $0x8] sm:$0xff]
    %v382 = vld [vmem:[%s379 + $0x10] sm:$0xff]
    %v383 = vld [vmem:[%s379 + $0x18] sm:$0xff]
    %v384 = vld [vmem:[%s379 + $0x20] sm:$0xff]
    %v385 = vld [vmem:[%s379 + $0x28] sm:$0xff]
    %v386 = vld [vmem:[%s379 + $0x30] sm:$0xff]
    %v387 = vld [vmem:[%s379 + $0x38] sm:$0xff]
    %v388 = vld [vmem:[%s379 + $0x40] sm:$0xff]
    %v389 = vld [vmem:[%s379 + $0x48] sm:$0xff]
    %v390 = vld [vmem:[%s379 + $0x50] sm:$0xff]
    %v391 = vld [vmem:[%s379 + $0x58] sm:$0xff]
    %v392 = vld [vmem:[%s379 + $0x60] sm:$0xff]
    %v393 = vld [vmem:[%s379 + $0x68] sm:$0xff]
    %v394 = vld [vmem:[%s379 + $0x70] sm:$0xff]
    %v395 = vld [vmem:[%s379 + $0x78] sm:$0xff]
    %396 = vmatprep.subr.mxu0 0.0
    %397 = vmatpush1.msra.mxu0 %v380
    %398 = vmatprep.subr.mxu0 0.0
    %399 = vmatpush1.msra.mxu0 %v381
    %400 = vmatprep.subr.mxu0 0.0
    %401 = vmatpush1.msra.mxu0 %v382
    %402 = vmatprep.subr.mxu0 0.0
    %403 = vmatpush1.msra.mxu0 %v383
    %404 = vmatprep.subr.mxu0 0.0
    %405 = vmatpush1.msra.mxu0 %v384
    %406 = vmatprep.subr.mxu0 0.0
    %407 = vmatpush1.msra.mxu0 %v385
    %408 = vmatprep.subr.mxu0 0.0
    %409 = vmatpush1.msra.mxu0 %v386
    %410 = vmatprep.subr.mxu0 0.0
    %411 = vmatpush1.msra.mxu0 %v387
    %412 = vmatprep.subr.mxu0 0.0
    %413 = vmatpush1.msra.mxu0 %v388
    %414 = vmatprep.subr.mxu0 0.0
    %415 = vmatpush1.msra.mxu0 %v389
    %416 = vmatprep.subr.mxu0 0.0
    %417 = vmatpush1.msra.mxu0 %v390
    %418 = vmatprep.subr.mxu0 0.0
    %419 = vmatpush1.msra.mxu0 %v391
    %420 = vmatprep.subr.mxu0 0.0
    %421 = vmatpush1.msra.mxu0 %v392
    %422 = vmatprep.subr.mxu0 0.0
    %423 = vmatpush1.msra.mxu0 %v393
    %424 = vmatprep.subr.mxu0 0.0
    %425 = vmatpush1.msra.mxu0 %v394
    %426 = vmatprep.subr.mxu0 0.0
    %427 = vmatpush1.msra.mxu0 %v395
    %428 = vmatprep.subr.mxu0 0.0
    %429 = vmatpush1.msra.mxu0 0.0
    %430 = vmatprep.subr.mxu0 0.0
    %431 = vmatpush1.msra.mxu0 0.0
    %432 = vmatprep.subr.mxu0 0.0
    %433 = vmatpush1.msra.mxu0 0.0
    %434 = vmatprep.subr.mxu0 0.0
    %435 = vmatpush1.msra.mxu0 0.0
    %436 = vmatprep.subr.mxu0 0.0
    %437 = vmatpush1.msra.mxu0 0.0
    %438 = vmatprep.subr.mxu0 0.0
    %439 = vmatpush1.msra.mxu0 0.0
    %440 = vmatprep.subr.mxu0 0.0
    %441 = vmatpush1.msra.mxu0 0.0
    %442 = vmatprep.subr.mxu0 0.0
    %443 = vmatpush1.msra.mxu0 0.0
    %444 = vmatprep.subr.mxu0 0.0
    %445 = vmatpush1.msra.mxu0 0.0
    %446 = vmatprep.subr.mxu0 0.0
    %447 = vmatpush1.msra.mxu0 0.0
    %448 = vmatprep.subr.mxu0 0.0
    %449 = vmatpush1.msra.mxu0 0.0
    %450 = vmatprep.subr.mxu0 0.0
    %451 = vmatpush1.msra.mxu0 0.0
    %452 = vmatprep.subr.mxu0 0.0
    %453 = vmatpush1.msra.mxu0 0.0
    %454 = vmatprep.subr.mxu0 0.0
    %455 = vmatpush1.msra.mxu0 0.0
    %456 = vmatprep.subr.mxu0 0.0
    %457 = vmatpush1.msra.mxu0 0.0
    %458 = vmatprep.subr.mxu0 0.0
    %459 = vmatpush1.msra.mxu0 0.0
    %460 = vmatprep.mubr.f32.mxu0 0.0
    %461 = vmatmul.mubr.f32.gmra.mrb[0].mxu0 %v172
    %v462 = vpop.f32.mrb[0].mxu0
    %v463 = vadd.f32 0.0, %v462
    %v464 = vpop.f32.mrb[0].mxu0
    %465 = vmatprep.mubr.f32.mxu0 0.0
    %466 = vmatmul.mubr.f32.gmra.mrb[0].mxu0 %v173
    %v467 = vpop.f32.mrb[0].mxu0
    %v468 = vadd.f32 0.0, %v467
    %v469 = vpop.f32.mrb[0].mxu0
    %470 = vmatprep.mubr.f32.mxu0 0.0
    %471 = vmatmul.mubr.f32.gmra.mrb[0].mxu0 %v174
    %v472 = vpop.f32.mrb[0].mxu0
    %v473 = vadd.f32 0.0, %v472
    %v474 = vpop.f32.mrb[0].mxu0
    %475 = vmatprep.mubr.f32.mxu0 0.0
    %476 = vmatmul.mubr.f32.gmra.mrb[0].mxu0 %v175
    %v477 = vpop.f32.mrb[0].mxu0
    %v478 = vadd.f32 0.0, %v477
    %v479 = vpop.f32.mrb[0].mxu0
    %480 = vdwg.mxu0
    %v481 = vadd.f32 %v361, %v463
    %v482 = vadd.f32 %v366, %v468
    %v483 = vadd.f32 %v371, %v473
    %v484 = vadd.f32 %v376, %v478
    %v485 = vadd.f32 %v481, %v482
    %v486 = vadd.f32 %v485, %v483
    %v487 = vadd.f32 %v486, %v484
    %v488 = vrot.slane %v487, 4
    %v489 = vadd.f32 %v487, %v488
    %v490 = vrot.slane %v489, 2
    %v491 = vadd.f32 %v489, %v490
    %v492 = vrot.slane %v491, 1
    %v493 = vadd.f32 %v491, %v492
    %v494 = vmul.f32 %v481, %v481
    %v495 = vmul.f32 %v482, %v482
    %v496 = vmul.f32 %v483, %v483
    %v497 = vmul.f32 %v484, %v484
    %v498 = vadd.f32 %v494, %v495
    %v499 = vadd.f32 %v498, %v496
    %v500 = vadd.f32 %v499, %v497
    %v501 = vrot.slane %v500, 4
    %v502 = vadd.f32 %v500, %v501
    %v503 = vrot.slane %v502, 2
    %v504 = vadd.f32 %v502, %v503
    %v505 = vrot.slane %v504, 1
    %v506 = vadd.f32 %v504, %v505
    %v507 = vld [vmem:[#allocation8] sm:$0xff]
    %v508 = vld [vmem:[#allocation8 + $0x8] sm:$0xff]
    %v509 = vld [vmem:[#allocation8 + $0x10] sm:$0xff]
    %v510 = vld [vmem:[#allocation8 + $0x18] sm:$0xff]
    %v511 = vld [vmem:[#allocation8 + $0x20] sm:$0xff]
    %v512 = vld [vmem:[#allocation8 + $0x28] sm:$0xff]
    %v513 = vld [vmem:[#allocation8 + $0x30] sm:$0xff]
    %v514 = vld [vmem:[#allocation8 + $0x38] sm:$0xff]
    %v515 = vld [vmem:[#allocation8 + $0x40] sm:$0xff]
    %v516 = vld [vmem:[#allocation8 + $0x48] sm:$0xff]
    %v517 = vld [vmem:[#allocation8 + $0x50] sm:$0xff]
    %v518 = vld [vmem:[#allocation8 + $0x58] sm:$0xff]
    %v519 = vld [vmem:[#allocation8 + $0x60] sm:$0xff]
    %v520 = vld [vmem:[#allocation8 + $0x68] sm:$0xff]
    %v521 = vld [vmem:[#allocation8 + $0x70] sm:$0xff]
    %v522 = vld [vmem:[#allocation8 + $0x78] sm:$0xff]
    %523 = vmatprep.subr.mxu0 0.0
    %524 = vmatpush1.msra.mxu0 %v507
    %525 = vmatprep.subr.mxu0 0.0
    %526 = vmatpush1.msra.mxu0 %v508
    %527 = vmatprep.subr.mxu0 0.0
    %528 = vmatpush1.msra.mxu0 %v509
    %529 = vmatprep.subr.mxu0 0.0
    %530 = vmatpush1.msra.mxu0 %v510
    %531 = vmatprep.subr.mxu0 0.0
    %532 = vmatpush1.msra.mxu0 %v511
    %533 = vmatprep.subr.mxu0 0.0
    %534 = vmatpush1.msra.mxu0 %v512
    %535 = vmatprep.subr.mxu0 0.0
    %536 = vmatpush1.msra.mxu0 %v513
    %537 = vmatprep.subr.mxu0 0.0
    %538 = vmatpush1.msra.mxu0 %v514
    %539 = vmatprep.subr.mxu0 0.0
    %540 = vmatpush1.msra.mxu0 %v515
    %541 = vmatprep.subr.mxu0 0.0
    %542 = vmatpush1.msra.mxu0 %v516
    %543 = vmatprep.subr.mxu0 0.0
    %544 = vmatpush1.msra.mxu0 %v517
    %545 = vmatprep.subr.mxu0 0.0
    %546 = vmatpush1.msra.mxu0 %v518
    %547 = vmatprep.subr.mxu0 0.0
    %548 = vmatpush1.msra.mxu0 %v519
    %549 = vmatprep.subr.mxu0 0.0
    %550 = vmatpush1.msra.mxu0 %v520
    %551 = vmatprep.subr.mxu0 0.0
    %552 = vmatpush1.msra.mxu0 %v521
    %553 = vmatprep.subr.mxu0 0.0
    %554 = vmatpush1.msra.mxu0 %v522
    %555 = vmatprep.subr.mxu0 0.0
    %556 = vmatpush1.msra.mxu0 0.0
    %557 = vmatprep.subr.mxu0 0.0
    %558 = vmatpush1.msra.mxu0 0.0
    %559 = vmatprep.subr.mxu0 0.0
    %560 = vmatpush1.msra.mxu0 0.0
    %561 = vmatprep.subr.mxu0 0.0
    %562 = vmatpush1.msra.mxu0 0.0
    %563 = vmatprep.subr.mxu0 0.0
    %564 = vmatpush1.msra.mxu0 0.0
    %565 = vmatprep.subr.mxu0 0.0
    %566 = vmatpush1.msra.mxu0 0.0
    %567 = vmatprep.subr.mxu0 0.0
    %568 = vmatpush1.msra.mxu0 0.0
    %569 = vmatprep.subr.mxu0 0.0
    %570 = vmatpush1.msra.mxu0 0.0
    %571 = vmatprep.subr.mxu0 0.0
    %572 = vmatpush1.msra.mxu0 0.0
    %573 = vmatprep.subr.mxu0 0.0
    %574 = vmatpush1.msra.mxu0 0.0
    %575 = vmatprep.subr.mxu0 0.0
    %576 = vmatpush1.msra.mxu0 0.0
    %577 = vmatprep.subr.mxu0 0.0
    %578 = vmatpush1.msra.mxu0 0.0
    %579 = vmatprep.subr.mxu0 0.0
    %580 = vmatpush1.msra.mxu0 0.0
    %581 = vmatprep.subr.mxu0 0.0
    %582 = vmatpush1.msra.mxu0 0.0
    %583 = vmatprep.subr.mxu0 0.0
    %584 = vmatpush1.msra.mxu0 0.0
    %585 = vmatprep.subr.mxu0 0.0
    %586 = vmatpush1.msra.mxu0 0.0
    %587 = vmatprep.mubr.f32.mxu0 0.0
    %588 = vmatmul.mubr.f32.gmra.mrb[0].mxu0 %v493
    %v589 = vpop.f32.mrb[0].mxu0
    %v590 = vadd.f32 0.0, %v589
    %v591 = vpop.f32.mrb[0].mxu0
    %592 = vdwg.mxu0
    %v593 = vmul.f32 %v590, 0.001953125
    %594 = vmatprep.subr.mxu0 0.0
    %595 = vmatpush1.msra.mxu0 %v507
    %596 = vmatprep.subr.mxu0 0.0
    %597 = vmatpush1.msra.mxu0 %v508
    %598 = vmatprep.subr.mxu0 0.0
    %599 = vmatpush1.msra.mxu0 %v509
    %600 = vmatprep.subr.mxu0 0.0
    %601 = vmatpush1.msra.mxu0 %v510
    %602 = vmatprep.subr.mxu0 0.0
    %603 = vmatpush1.msra.mxu0 %v511
    %604 = vmatprep.subr.mxu0 0.0
    %605 = vmatpush1.msra.mxu0 %v512
    %606 = vmatprep.subr.mxu0 0.0
    %607 = vmatpush1.msra.mxu0 %v513
    %608 = vmatprep.subr.mxu0 0.0
    %609 = vmatpush1.msra.mxu0 %v514
    %610 = vmatprep.subr.mxu0 0.0
    %611 = vmatpush1.msra.mxu0 %v515
    %612 = vmatprep.subr.mxu0 0.0
    %613 = vmatpush1.msra.mxu0 %v516
    %614 = vmatprep.subr.mxu0 0.0
    %615 = vmatpush1.msra.mxu0 %v517
    %616 = vmatprep.subr.mxu0 0.0
    %617 = vmatpush1.msra.mxu0 %v518
    %618 = vmatprep.subr.mxu0 0.0
    %619 = vmatpush1.msra.mxu0 %v519
    %620 = vmatprep.subr.mxu0 0.0
    %621 = vmatpush1.msra.mxu0 %v520
    %622 = vmatprep.subr.mxu0 0.0
    %623 = vmatpush1.msra.mxu0 %v521
    %624 = vmatprep.subr.mxu0 0.0
    %625 = vmatpush1.msra.mxu0 %v522
    %626 = vmatprep.subr.mxu0 0.0
    %627 = vmatpush1.msra.mxu0 0.0
    %628 = vmatprep.subr.mxu0 0.0
    %629 = vmatpush1.msra.mxu0 0.0
    %630 = vmatprep.subr.mxu0 0.0
    %631 = vmatpush1.msra.mxu0 0.0
    %632 = vmatprep.subr.mxu0 0.0
    %633 = vmatpush1.msra.mxu0 0.0
    %634 = vmatprep.subr.mxu0 0.0
    %635 = vmatpush1.msra.mxu0 0.0
    %636 = vmatprep.subr.mxu0 0.0
    %637 = vmatpush1.msra.mxu0 0.0
    %638 = vmatprep.subr.mxu0 0.0
    %639 = vmatpush1.msra.mxu0 0.0
    %640 = vmatprep.subr.mxu0 0.0
    %641 = vmatpush1.msra.mxu0 0.0
    %642 = vmatprep.subr.mxu0 0.0
    %643 = vmatpush1.msra.mxu0 0.0
    %644 = vmatprep.subr.mxu0 0.0
    %645 = vmatpush1.msra.mxu0 0.0
    %646 = vmatprep.subr.mxu0 0.0
    %647 = vmatpush1.msra.mxu0 0.0
    %648 = vmatprep.subr.mxu0 0.0
    %649 = vmatpush1.msra.mxu0 0.0
    %650 = vmatprep.subr.mxu0 0.0
    %651 = vmatpush1.msra.mxu0 0.0
    %652 = vmatprep.subr.mxu0 0.0
    %653 = vmatpush1.msra.mxu0 0.0
    %654 = vmatprep.subr.mxu0 0.0
    %655 = vmatpush1.msra.mxu0 0.0
    %656 = vmatprep.subr.mxu0 0.0
    %657 = vmatpush1.msra.mxu0 0.0
    %658 = vmatprep.mubr.f32.mxu0 0.0
    %659 = vmatmul.mubr.f32.gmra.mrb[0].mxu0 %v506
    %v660 = vpop.f32.mrb[0].mxu0
    %v661 = vadd.f32 0.0, %v660
    %v662 = vpop.f32.mrb[0].mxu0
    %663 = vdwg.mxu0
    %v664 = vmul.f32 %v661, 0.001953125
    %v665 = vmul.f32 %v593, %v593
    %v666 = vsub.f32 %v664, %v665
    %v667 = vld [vmem:[%s4] sm:$0x1]
    %v668 = vadd.f32 %v666, 1e-05
    %v669 = vrsqrt.pop %v668
    %v670 = vmul.f32 %v667, %v669
    %v671 = vld [vmem:[%s5] sm:$0x1]
    %v672 = vmul.f32 %v593, %v670
    %v673 = vsub.f32 %v671, %v672
    %v675 = vlaneseq
    %v676 = vshrl.u32 %v675, 7
    %v677 = vsub.s32 0, %v676
    %v678 = vrot.slane %v670, %v677
    %v680 = vmul.f32 %v481, %v678
    %v681 = vmul.f32 %v482, %v678
    %v682 = vmul.f32 %v483, %v678
    %v683 = vmul.f32 %v484, %v678
    %v685 = vlaneseq
    %v686 = vshrl.u32 %v685, 7
    %v687 = vsub.s32 0, %v686
    %v688 = vrot.slane %v673, %v687
    %v690 = vadd.f32 %v680, %v688
    %v691 = vadd.f32 %v681, %v688
    %v692 = vadd.f32 %v682, %v688
    %v693 = vadd.f32 %v683, %v688
    %vm694 = vcmp.gt.f32.partialorder %v690, 0.0
    %vm695 = vcmp.gt.f32.partialorder %v691, 0.0
    %vm696 = vcmp.gt.f32.partialorder %v692, 0.0
    %vm697 = vcmp.gt.f32.partialorder %v693, 0.0
    %v698 = vmul.f32 %v690, 1.442695
    %v699 = vpow.pop %v698
    %v700 = vmul.f32 %v691, 1.442695
    %v701 = vpow.pop %v700
    %v702 = vmul.f32 %v692, 1.442695
    %v703 = vpow.pop %v702
    %v704 = vmul.f32 %v693, 1.442695
    %v705 = vpow.pop %v704
    %v706 = vsub.f32 %v699, 1.0
    %v707 = vsub.f32 %v701, 1.0
    %v708 = vsub.f32 %v703, 1.0
    %v709 = vsub.f32 %v705, 1.0
    %v710 = vmul.f32 %v706, 1.6732632
    %v711 = vmul.f32 %v707, 1.6732632
    %v712 = vmul.f32 %v708, 1.6732632
    %v713 = vmul.f32 %v709, 1.6732632
    %v714 = vsel %vm694, %v690, %v710
    %v715 = vsel %vm695, %v691, %v711
    %v716 = vsel %vm696, %v692, %v712
    %v717 = vsel %vm697, %v693, %v713
    %v718 = vmul.f32 %v714, 1.050701
    %v719 = vmul.f32 %v715, 1.050701
    %v720 = vmul.f32 %v716, 1.050701
    %v721 = vmul.f32 %v717, 1.050701
    %v722 = vrot.slane %v718, 7
    %v723 = vrot.slane %v719, 7
    %v724 = vrot.slane %v720, 7
    %v725 = vrot.slane %v721, 7
    %v726 = vsel %vm154, %v724, %v725
    %v727 = vsel %vm154, %v723, %v724
    %v728 = vsel %vm154, %v722, %v723
    %v729 = vsel %vm154, %v725, %v722
    %v730 = vsel %vm142, %v729, 0.0
    %v731 = vsel %vm143, %v728, 0.0
    %v732 = vsel %vm144, %v727, 0.0
    %v733 = vsel %vm145, %v726, 0.0
    %v734 = vrot.slane %v718, 1
    %v735 = vrot.slane %v719, 1
    %v736 = vrot.slane %v720, 1
    %v737 = vrot.slane %v721, 1
    %v738 = vsel %vm167, %v736, %v737
    %v739 = vsel %vm167, %v735, %v736
    %v740 = vsel %vm167, %v734, %v735
    %v741 = vsel %vm167, %v737, %v734
    %v742 = vsel %vm146, %v740, 0.0
    %v743 = vsel %vm147, %v739, 0.0
    %v744 = vsel %vm148, %v738, 0.0
    %v745 = vsel %vm149, %v741, 0.0
    %v746 = vld [vmem:[#allocation7] sm:$0xff]
    %v747 = vld [vmem:[#allocation7 + $0x8] sm:$0xff]
    %v748 = vld [vmem:[#allocation7 + $0x10] sm:$0xff]
    %v749 = vld [vmem:[#allocation7 + $0x18] sm:$0xff]
    %v750 = vld [vmem:[#allocation7 + $0x20] sm:$0xff]
    %v751 = vld [vmem:[#allocation7 + $0x28] sm:$0xff]
    %v752 = vld [vmem:[#allocation7 + $0x30] sm:$0xff]
    %v753 = vld [vmem:[#allocation7 + $0x38] sm:$0xff]
    %v754 = vld [vmem:[#allocation7 + $0x40] sm:$0xff]
    %v755 = vld [vmem:[#allocation7 + $0x48] sm:$0xff]
    %v756 = vld [vmem:[#allocation7 + $0x50] sm:$0xff]
    %v757 = vld [vmem:[#allocation7 + $0x58] sm:$0xff]
    %v758 = vld [vmem:[#allocation7 + $0x60] sm:$0xff]
    %v759 = vld [vmem:[#allocation7 + $0x68] sm:$0xff]
    %v760 = vld [vmem:[#allocation7 + $0x70] sm:$0xff]
    %v761 = vld [vmem:[#allocation7 + $0x78] sm:$0xff]
    %s762 = scalar_lea.vmem [#allocation7], 128
    %v763 = vld [vmem:[%s762] sm:$0xff]
    %v764 = vld [vmem:[%s762 + $0x8] sm:$0xff]
    %v765 = vld [vmem:[%s762 + $0x10] sm:$0xff]
    %v766 = vld [vmem:[%s762 + $0x18] sm:$0xff]
    %v767 = vld [vmem:[%s762 + $0x20] sm:$0xff]
    %v768 = vld [vmem:[%s762 + $0x28] sm:$0xff]
    %v769 = vld [vmem:[%s762 + $0x30] sm:$0xff]
    %v770 = vld [vmem:[%s762 + $0x38] sm:$0xff]
    %v771 = vld [vmem:[%s762 + $0x40] sm:$0xff]
    %v772 = vld [vmem:[%s762 + $0x48] sm:$0xff]
    %v773 = vld [vmem:[%s762 + $0x50] sm:$0xff]
    %v774 = vld [vmem:[%s762 + $0x58] sm:$0xff]
    %v775 = vld [vmem:[%s762 + $0x60] sm:$0xff]
    %v776 = vld [vmem:[%s762 + $0x68] sm:$0xff]
    %v777 = vld [vmem:[%s762 + $0x70] sm:$0xff]
    %v778 = vld [vmem:[%s762 + $0x78] sm:$0xff]
    %779 = vmatprep.subr.mxu0 0.0
    %780 = vmatpush1.msra.mxu0 %v763
    %781 = vmatprep.subr.mxu0 0.0
    %782 = vmatpush1.msra.mxu0 %v764
    %783 = vmatprep.subr.mxu0 0.0
    %784 = vmatpush1.msra.mxu0 %v765
    %785 = vmatprep.subr.mxu0 0.0
    %786 = vmatpush1.msra.mxu0 %v766
    %787 = vmatprep.subr.mxu0 0.0
    %788 = vmatpush1.msra.mxu0 %v767
    %789 = vmatprep.subr.mxu0 0.0
    %790 = vmatpush1.msra.mxu0 %v768
    %791 = vmatprep.subr.mxu0 0.0
    %792 = vmatpush1.msra.mxu0 %v769
    %793 = vmatprep.subr.mxu0 0.0
    %794 = vmatpush1.msra.mxu0 %v770
    %795 = vmatprep.subr.mxu0 0.0
    %796 = vmatpush1.msra.mxu0 %v771
    %797 = vmatprep.subr.mxu0 0.0
    %798 = vmatpush1.msra.mxu0 %v772
    %799 = vmatprep.subr.mxu0 0.0
    %800 = vmatpush1.msra.mxu0 %v773
    %801 = vmatprep.subr.mxu0 0.0
    %802 = vmatpush1.msra.mxu0 %v774
    %803 = vmatprep.subr.mxu0 0.0
    %804 = vmatpush1.msra.mxu0 %v775
    %805 = vmatprep.subr.mxu0 0.0
    %806 = vmatpush1.msra.mxu0 %v776
    %807 = vmatprep.subr.mxu0 0.0
    %808 = vmatpush1.msra.mxu0 %v777
    %809 = vmatprep.subr.mxu0 0.0
    %810 = vmatpush1.msra.mxu0 %v778
    %811 = vmatprep.subr.mxu0 0.0
    %812 = vmatpush1.msra.mxu0 0.0
    %813 = vmatprep.subr.mxu0 0.0
    %814 = vmatpush1.msra.mxu0 0.0
    %815 = vmatprep.subr.mxu0 0.0
    %816 = vmatpush1.msra.mxu0 0.0
    %817 = vmatprep.subr.mxu0 0.0
    %818 = vmatpush1.msra.mxu0 0.0
    %819 = vmatprep.subr.mxu0 0.0
    %820 = vmatpush1.msra.mxu0 0.0
    %821 = vmatprep.subr.mxu0 0.0
    %822 = vmatpush1.msra.mxu0 0.0
    %823 = vmatprep.subr.mxu0 0.0
    %824 = vmatpush1.msra.mxu0 0.0
    %825 = vmatprep.subr.mxu0 0.0
    %826 = vmatpush1.msra.mxu0 0.0
    %827 = vmatprep.subr.mxu0 0.0
    %828 = vmatpush1.msra.mxu0 0.0
    %829 = vmatprep.subr.mxu0 0.0
    %830 = vmatpush1.msra.mxu0 0.0
    %831 = vmatprep.subr.mxu0 0.0
    %832 = vmatpush1.msra.mxu0 0.0
    %833 = vmatprep.subr.mxu0 0.0
    %834 = vmatpush1.msra.mxu0 0.0
    %835 = vmatprep.subr.mxu0 0.0
    %836 = vmatpush1.msra.mxu0 0.0
    %837 = vmatprep.subr.mxu0 0.0
    %838 = vmatpush1.msra.mxu0 0.0
    %839 = vmatprep.subr.mxu0 0.0
    %840 = vmatpush1.msra.mxu0 0.0
    %841 = vmatprep.subr.mxu0 0.0
    %842 = vmatpush1.msra.mxu0 0.0
    %843 = vmatprep.mubr.f32.mxu0 0.0
    %844 = vmatmul.mubr.f32.gmra.mrb[0].mxu0 %v718
    %v845 = vpop.f32.mrb[0].mxu0
    %v846 = vadd.f32 0.0, %v845
    %v847 = vpop.f32.mrb[0].mxu0
    %848 = vmatprep.mubr.f32.mxu0 0.0
    %849 = vmatmul.mubr.f32.gmra.mrb[0].mxu0 %v719
    %v850 = vpop.f32.mrb[0].mxu0
    %v851 = vadd.f32 0.0, %v850
    %v852 = vpop.f32.mrb[0].mxu0
    %853 = vmatprep.mubr.f32.mxu0 0.0
    %854 = vmatmul.mubr.f32.gmra.mrb[0].mxu0 %v720
    %v855 = vpop.f32.mrb[0].mxu0
    %v856 = vadd.f32 0.0, %v855
    %v857 = vpop.f32.mrb[0].mxu0
    %858 = vmatprep.mubr.f32.mxu0 0.0
    %859 = vmatmul.mubr.f32.gmra.mrb[0].mxu0 %v721
    %v860 = vpop.f32.mrb[0].mxu0
    %v861 = vadd.f32 0.0, %v860
    %v862 = vpop.f32.mrb[0].mxu0
    %863 = vdwg.mxu0
    %864 = vmatprep.subr.mxu0 0.0
    %865 = vmatpush1.msra.mxu0 %v746
    %866 = vmatprep.subr.mxu0 0.0
    %867 = vmatpush1.msra.mxu0 %v747
    %868 = vmatprep.subr.mxu0 0.0
    %869 = vmatpush1.msra.mxu0 %v748
    %870 = vmatprep.subr.mxu0 0.0
    %871 = vmatpush1.msra.mxu0 %v749
    %872 = vmatprep.subr.mxu0 0.0
    %873 = vmatpush1.msra.mxu0 %v750
    %874 = vmatprep.subr.mxu0 0.0
    %875 = vmatpush1.msra.mxu0 %v751
    %876 = vmatprep.subr.mxu0 0.0
    %877 = vmatpush1.msra.mxu0 %v752
    %878 = vmatprep.subr.mxu0 0.0
    %879 = vmatpush1.msra.mxu0 %v753
    %880 = vmatprep.subr.mxu0 0.0
    %881 = vmatpush1.msra.mxu0 %v754
    %882 = vmatprep.subr.mxu0 0.0
    %883 = vmatpush1.msra.mxu0 %v755
    %884 = vmatprep.subr.mxu0 0.0
    %885 = vmatpush1.msra.mxu0 %v756
    %886 = vmatprep.subr.mxu0 0.0
    %887 = vmatpush1.msra.mxu0 %v757
    %888 = vmatprep.subr.mxu0 0.0
    %889 = vmatpush1.msra.mxu0 %v758
    %890 = vmatprep.subr.mxu0 0.0
    %891 = vmatpush1.msra.mxu0 %v759
    %892 = vmatprep.subr.mxu0 0.0
    %893 = vmatpush1.msra.mxu0 %v760
    %894 = vmatprep.subr.mxu0 0.0
    %895 = vmatpush1.msra.mxu0 %v761
    %896 = vmatprep.subr.mxu0 0.0
    %897 = vmatpush1.msra.mxu0 0.0
    %898 = vmatprep.subr.mxu0 0.0
    %899 = vmatpush1.msra.mxu0 0.0
    %900 = vmatprep.subr.mxu0 0.0
    %901 = vmatpush1.msra.mxu0 0.0
    %902 = vmatprep.subr.mxu0 0.0
    %903 = vmatpush1.msra.mxu0 0.0
    %904 = vmatprep.subr.mxu0 0.0
    %905 = vmatpush1.msra.mxu0 0.0
    %906 = vmatprep.subr.mxu0 0.0
    %907 = vmatpush1.msra.mxu0 0.0
    %908 = vmatprep.subr.mxu0 0.0
    %909 = vmatpush1.msra.mxu0 0.0
    %910 = vmatprep.subr.mxu0 0.0
    %911 = vmatpush1.msra.mxu0 0.0
    %912 = vmatprep.subr.mxu0 0.0
    %913 = vmatpush1.msra.mxu0 0.0
    %914 = vmatprep.subr.mxu0 0.0
    %915 = vmatpush1.msra.mxu0 0.0
    %916 = vmatprep.subr.mxu0 0.0
    %917 = vmatpush1.msra.mxu0 0.0
    %918 = vmatprep.subr.mxu0 0.0
    %919 = vmatpush1.msra.mxu0 0.0
    %920 = vmatprep.subr.mxu0 0.0
    %921 = vmatpush1.msra.mxu0 0.0
    %922 = vmatprep.subr.mxu0 0.0
    %923 = vmatpush1.msra.mxu0 0.0
    %924 = vmatprep.subr.mxu0 0.0
    %925 = vmatpush1.msra.mxu0 0.0
    %926 = vmatprep.subr.mxu0 0.0
    %927 = vmatpush1.msra.mxu0 0.0
    %928 = vmatprep.mubr.f32.mxu0 0.0
    %929 = vmatmul.mubr.f32.gmra.mrb[0].mxu0 %v730
    %v930 = vpop.f32.mrb[0].mxu0
    %v931 = vadd.f32 %v846, %v930
    %v932 = vpop.f32.mrb[0].mxu0
    %933 = vmatprep.mubr.f32.mxu0 0.0
    %934 = vmatmul.mubr.f32.gmra.mrb[0].mxu0 %v731
    %v935 = vpop.f32.mrb[0].mxu0
    %v936 = vadd.f32 %v851, %v935
    %v937 = vpop.f32.mrb[0].mxu0
    %938 = vmatprep.mubr.f32.mxu0 0.0
    %939 = vmatmul.mubr.f32.gmra.mrb[0].mxu0 %v732
    %v940 = vpop.f32.mrb[0].mxu0
    %v941 = vadd.f32 %v856, %v940
    %v942 = vpop.f32.mrb[0].mxu0
    %943 = vmatprep.mubr.f32.mxu0 0.0
    %944 = vmatmul.mubr.f32.gmra.mrb[0].mxu0 %v733
    %v945 = vpop.f32.mrb[0].mxu0
    %v946 = vadd.f32 %v861, %v945
    %v947 = vpop.f32.mrb[0].mxu0
    %948 = vdwg.mxu0
    %s949 = scalar_lea.vmem [#allocation7], 256
    %v950 = vld [vmem:[%s949] sm:$0xff]
    %v951 = vld [vmem:[%s949 + $0x8] sm:$0xff]
    %v952 = vld [vmem:[%s949 + $0x10] sm:$0xff]
    %v953 = vld [vmem:[%s949 + $0x18] sm:$0xff]
    %v954 = vld [vmem:[%s949 + $0x20] sm:$0xff]
    %v955 = vld [vmem:[%s949 + $0x28] sm:$0xff]
    %v956 = vld [vmem:[%s949 + $0x30] sm:$0xff]
    %v957 = vld [vmem:[%s949 + $0x38] sm:$0xff]
    %v958 = vld [vmem:[%s949 + $0x40] sm:$0xff]
    %v959 = vld [vmem:[%s949 + $0x48] sm:$0xff]
    %v960 = vld [vmem:[%s949 + $0x50] sm:$0xff]
    %v961 = vld [vmem:[%s949 + $0x58] sm:$0xff]
    %v962 = vld [vmem:[%s949 + $0x60] sm:$0xff]
    %v963 = vld [vmem:[%s949 + $0x68] sm:$0xff]
    %v964 = vld [vmem:[%s949 + $0x70] sm:$0xff]
    %v965 = vld [vmem:[%s949 + $0x78] sm:$0xff]
    %966 = vmatprep.subr.mxu0 0.0
    %967 = vmatpush1.msra.mxu0 %v950
    %968 = vmatprep.subr.mxu0 0.0
    %969 = vmatpush1.msra.mxu0 %v951
    %970 = vmatprep.subr.mxu0 0.0
    %971 = vmatpush1.msra.mxu0 %v952
    %972 = vmatprep.subr.mxu0 0.0
    %973 = vmatpush1.msra.mxu0 %v953
    %974 = vmatprep.subr.mxu0 0.0
    %975 = vmatpush1.msra.mxu0 %v954
    %976 = vmatprep.subr.mxu0 0.0
    %977 = vmatpush1.msra.mxu0 %v955
    %978 = vmatprep.subr.mxu0 0.0
    %979 = vmatpush1.msra.mxu0 %v956
    %980 = vmatprep.subr.mxu0 0.0
    %981 = vmatpush1.msra.mxu0 %v957
    %982 = vmatprep.subr.mxu0 0.0
    %983 = vmatpush1.msra.mxu0 %v958
    %984 = vmatprep.subr.mxu0 0.0
    %985 = vmatpush1.msra.mxu0 %v959
    %986 = vmatprep.subr.mxu0 0.0
    %987 = vmatpush1.msra.mxu0 %v960
    %988 = vmatprep.subr.mxu0 0.0
    %989 = vmatpush1.msra.mxu0 %v961
    %990 = vmatprep.subr.mxu0 0.0
    %991 = vmatpush1.msra.mxu0 %v962
    %992 = vmatprep.subr.mxu0 0.0
    %993 = vmatpush1.msra.mxu0 %v963
    %994 = vmatprep.subr.mxu0 0.0
    %995 = vmatpush1.msra.mxu0 %v964
    %996 = vmatprep.subr.mxu0 0.0
    %997 = vmatpush1.msra.mxu0 %v965
    %998 = vmatprep.subr.mxu0 0.0
    %999 = vmatpush1.msra.mxu0 0.0
    %1000 = vmatprep.subr.mxu0 0.0
    %1001 = vmatpush1.msra.mxu0 0.0
    %1002 = vmatprep.subr.mxu0 0.0
    %1003 = vmatpush1.msra.mxu0 0.0
    %1004 = vmatprep.subr.mxu0 0.0
    %1005 = vmatpush1.msra.mxu0 0.0
    %1006 = vmatprep.subr.mxu0 0.0
    %1007 = vmatpush1.msra.mxu0 0.0
    %1008 = vmatprep.subr.mxu0 0.0
    %1009 = vmatpush1.msra.mxu0 0.0
    %1010 = vmatprep.subr.mxu0 0.0
    %1011 = vmatpush1.msra.mxu0 0.0
    %1012 = vmatprep.subr.mxu0 0.0
    %1013 = vmatpush1.msra.mxu0 0.0
    %1014 = vmatprep.subr.mxu0 0.0
    %1015 = vmatpush1.msra.mxu0 0.0
    %1016 = vmatprep.subr.mxu0 0.0
    %1017 = vmatpush1.msra.mxu0 0.0
    %1018 = vmatprep.subr.mxu0 0.0
    %1019 = vmatpush1.msra.mxu0 0.0
    %1020 = vmatprep.subr.mxu0 0.0
    %1021 = vmatpush1.msra.mxu0 0.0
    %1022 = vmatprep.subr.mxu0 0.0
    %1023 = vmatpush1.msra.mxu0 0.0
    %1024 = vmatprep.subr.mxu0 0.0
    %1025 = vmatpush1.msra.mxu0 0.0
    %1026 = vmatprep.subr.mxu0 0.0
    %1027 = vmatpush1.msra.mxu0 0.0
    %1028 = vmatprep.subr.mxu0 0.0
    %1029 = vmatpush1.msra.mxu0 0.0
    %1030 = vmatprep.mubr.f32.mxu0 0.0
    %1031 = vmatmul.mubr.f32.gmra.mrb[0].mxu0 %v742
    %v1032 = vpop.f32.mrb[0].mxu0
    %v1033 = vadd.f32 0.0, %v1032
    %v1034 = vpop.f32.mrb[0].mxu0
    %1035 = vmatprep.mubr.f32.mxu0 0.0
    %1036 = vmatmul.mubr.f32.gmra.mrb[0].mxu0 %v743
    %v1037 = vpop.f32.mrb[0].mxu0
    %v1038 = vadd.f32 0.0, %v1037
    %v1039 = vpop.f32.mrb[0].mxu0
    %1040 = vmatprep.mubr.f32.mxu0 0.0
    %1041 = vmatmul.mubr.f32.gmra.mrb[0].mxu0 %v744
    %v1042 = vpop.f32.mrb[0].mxu0
    %v1043 = vadd.f32 0.0, %v1042
    %v1044 = vpop.f32.mrb[0].mxu0
    %1045 = vmatprep.mubr.f32.mxu0 0.0
    %1046 = vmatmul.mubr.f32.gmra.mrb[0].mxu0 %v745
    %v1047 = vpop.f32.mrb[0].mxu0
    %v1048 = vadd.f32 0.0, %v1047
    %v1049 = vpop.f32.mrb[0].mxu0
    %1050 = vdwg.mxu0
    %v1051 = vadd.f32 %v931, %v1033
    %v1052 = vadd.f32 %v936, %v1038
    %v1053 = vadd.f32 %v941, %v1043
    %v1054 = vadd.f32 %v946, %v1048
    %v1055 = vadd.f32 %v1051, %v1052
    %v1056 = vadd.f32 %v1055, %v1053
    %v1057 = vadd.f32 %v1056, %v1054
    %v1058 = vrot.slane %v1057, 4
    %v1059 = vadd.f32 %v1057, %v1058
    %v1060 = vrot.slane %v1059, 2
    %v1061 = vadd.f32 %v1059, %v1060
    %v1062 = vrot.slane %v1061, 1
    %v1063 = vadd.f32 %v1061, %v1062
    %v1064 = vmul.f32 %v1051, %v1051
    %v1065 = vmul.f32 %v1052, %v1052
    %v1066 = vmul.f32 %v1053, %v1053
    %v1067 = vmul.f32 %v1054, %v1054
    %v1068 = vadd.f32 %v1064, %v1065
    %v1069 = vadd.f32 %v1068, %v1066
    %v1070 = vadd.f32 %v1069, %v1067
    %v1071 = vrot.slane %v1070, 4
    %v1072 = vadd.f32 %v1070, %v1071
    %v1073 = vrot.slane %v1072, 2
    %v1074 = vadd.f32 %v1072, %v1073
    %v1075 = vrot.slane %v1074, 1
    %v1076 = vadd.f32 %v1074, %v1075
    %1077 = vmatprep.subr.mxu0 0.0
    %1078 = vmatpush1.msra.mxu0 %v507
    %1079 = vmatprep.subr.mxu0 0.0
    %1080 = vmatpush1.msra.mxu0 %v508
    %1081 = vmatprep.subr.mxu0 0.0
    %1082 = vmatpush1.msra.mxu0 %v509
    %1083 = vmatprep.subr.mxu0 0.0
    %1084 = vmatpush1.msra.mxu0 %v510
    %1085 = vmatprep.subr.mxu0 0.0
    %1086 = vmatpush1.msra.mxu0 %v511
    %1087 = vmatprep.subr.mxu0 0.0
    %1088 = vmatpush1.msra.mxu0 %v512
    %1089 = vmatprep.subr.mxu0 0.0
    %1090 = vmatpush1.msra.mxu0 %v513
    %1091 = vmatprep.subr.mxu0 0.0
    %1092 = vmatpush1.msra.mxu0 %v514
    %1093 = vmatprep.subr.mxu0 0.0
    %1094 = vmatpush1.msra.mxu0 %v515
    %1095 = vmatprep.subr.mxu0 0.0
    %1096 = vmatpush1.msra.mxu0 %v516
    %1097 = vmatprep.subr.mxu0 0.0
    %1098 = vmatpush1.msra.mxu0 %v517
    %1099 = vmatprep.subr.mxu0 0.0
    %1100 = vmatpush1.msra.mxu0 %v518
    %1101 = vmatprep.subr.mxu0 0.0
    %1102 = vmatpush1.msra.mxu0 %v519
    %1103 = vmatprep.subr.mxu0 0.0
    %1104 = vmatpush1.msra.mxu0 %v520
    %1105 = vmatprep.subr.mxu0 0.0
    %1106 = vmatpush1.msra.mxu0 %v521
    %1107 = vmatprep.subr.mxu0 0.0
    %1108 = vmatpush1.msra.mxu0 %v522
    %1109 = vmatprep.subr.mxu0 0.0
    %1110 = vmatpush1.msra.mxu0 0.0
    %1111 = vmatprep.subr.mxu0 0.0
    %1112 = vmatpush1.msra.mxu0 0.0
    %1113 = vmatprep.subr.mxu0 0.0
    %1114 = vmatpush1.msra.mxu0 0.0
    %1115 = vmatprep.subr.mxu0 0.0
    %1116 = vmatpush1.msra.mxu0 0.0
    %1117 = vmatprep.subr.mxu0 0.0
    %1118 = vmatpush1.msra.mxu0 0.0
    %1119 = vmatprep.subr.mxu0 0.0
    %1120 = vmatpush1.msra.mxu0 0.0
    %1121 = vmatprep.subr.mxu0 0.0
    %1122 = vmatpush1.msra.mxu0 0.0
    %1123 = vmatprep.subr.mxu0 0.0
    %1124 = vmatpush1.msra.mxu0 0.0
    %1125 = vmatprep.subr.mxu0 0.0
    %1126 = vmatpush1.msra.mxu0 0.0
    %1127 = vmatprep.subr.mxu0 0.0
    %1128 = vmatpush1.msra.mxu0 0.0
    %1129 = vmatprep.subr.mxu0 0.0
    %1130 = vmatpush1.msra.mxu0 0.0
    %1131 = vmatprep.subr.mxu0 0.0
    %1132 = vmatpush1.msra.mxu0 0.0
    %1133 = vmatprep.subr.mxu0 0.0
    %1134 = vmatpush1.msra.mxu0 0.0
    %1135 = vmatprep.subr.mxu0 0.0
    %1136 = vmatpush1.msra.mxu0 0.0
    %1137 = vmatprep.subr.mxu0 0.0
    %1138 = vmatpush1.msra.mxu0 0.0
    %1139 = vmatprep.subr.mxu0 0.0
    %1140 = vmatpush1.msra.mxu0 0.0
    %1141 = vmatprep.mubr.f32.mxu0 0.0
    %1142 = vmatmul.mubr.f32.gmra.mrb[0].mxu0 %v1063
    %v1143 = vpop.f32.mrb[0].mxu0
    %v1144 = vadd.f32 0.0, %v1143
    %v1145 = vpop.f32.mrb[0].mxu0
    %1146 = vdwg.mxu0
    %v1147 = vmul.f32 %v1144, 0.001953125
    %1148 = vmatprep.subr.mxu0 0.0
    %1149 = vmatpush1.msra.mxu0 %v507
    %1150 = vmatprep.subr.mxu0 0.0
    %1151 = vmatpush1.msra.mxu0 %v508
    %1152 = vmatprep.subr.mxu0 0.0
    %1153 = vmatpush1.msra.mxu0 %v509
    %1154 = vmatprep.subr.mxu0 0.0
    %1155 = vmatpush1.msra.mxu0 %v510
    %1156 = vmatprep.subr.mxu0 0.0
    %1157 = vmatpush1.msra.mxu0 %v511
    %1158 = vmatprep.subr.mxu0 0.0
    %1159 = vmatpush1.msra.mxu0 %v512
    %1160 = vmatprep.subr.mxu0 0.0
    %1161 = vmatpush1.msra.mxu0 %v513
    %1162 = vmatprep.subr.mxu0 0.0
    %1163 = vmatpush1.msra.mxu0 %v514
    %1164 = vmatprep.subr.mxu0 0.0
    %1165 = vmatpush1.msra.mxu0 %v515
    %1166 = vmatprep.subr.mxu0 0.0
    %1167 = vmatpush1.msra.mxu0 %v516
    %1168 = vmatprep.subr.mxu0 0.0
    %1169 = vmatpush1.msra.mxu0 %v517
    %1170 = vmatprep.subr.mxu0 0.0
    %1171 = vmatpush1.msra.mxu0 %v518
    %1172 = vmatprep.subr.mxu0 0.0
    %1173 = vmatpush1.msra.mxu0 %v519
    %1174 = vmatprep.subr.mxu0 0.0
    %1175 = vmatpush1.msra.mxu0 %v520
    %1176 = vmatprep.subr.mxu0 0.0
    %1177 = vmatpush1.msra.mxu0 %v521
    %1178 = vmatprep.subr.mxu0 0.0
    %1179 = vmatpush1.msra.mxu0 %v522
    %1180 = vmatprep.subr.mxu0 0.0
    %1181 = vmatpush1.msra.mxu0 0.0
    %1182 = vmatprep.subr.mxu0 0.0
    %1183 = vmatpush1.msra.mxu0 0.0
    %1184 = vmatprep.subr.mxu0 0.0
    %1185 = vmatpush1.msra.mxu0 0.0
    %1186 = vmatprep.subr.mxu0 0.0
    %1187 = vmatpush1.msra.mxu0 0.0
    %1188 = vmatprep.subr.mxu0 0.0
    %1189 = vmatpush1.msra.mxu0 0.0
    %1190 = vmatprep.subr.mxu0 0.0
    %1191 = vmatpush1.msra.mxu0 0.0
    %1192 = vmatprep.subr.mxu0 0.0
    %1193 = vmatpush1.msra.mxu0 0.0
    %1194 = vmatprep.subr.mxu0 0.0
    %1195 = vmatpush1.msra.mxu0 0.0
    %1196 = vmatprep.subr.mxu0 0.0
    %1197 = vmatpush1.msra.mxu0 0.0
    %1198 = vmatprep.subr.mxu0 0.0
    %1199 = vmatpush1.msra.mxu0 0.0
    %1200 = vmatprep.subr.mxu0 0.0
    %1201 = vmatpush1.msra.mxu0 0.0
    %1202 = vmatprep.subr.mxu0 0.0
    %1203 = vmatpush1.msra.mxu0 0.0
    %1204 = vmatprep.subr.mxu0 0.0
    %1205 = vmatpush1.msra.mxu0 0.0
    %1206 = vmatprep.subr.mxu0 0.0
    %1207 = vmatpush1.msra.mxu0 0.0
    %1208 = vmatprep.subr.mxu0 0.0
    %1209 = vmatpush1.msra.mxu0 0.0
    %1210 = vmatprep.subr.mxu0 0.0
    %1211 = vmatpush1.msra.mxu0 0.0
    %1212 = vmatprep.mubr.f32.mxu0 0.0
    %1213 = vmatmul.mubr.f32.gmra.mrb[0].mxu0 %v1076
    %v1214 = vpop.f32.mrb[0].mxu0
    %v1215 = vadd.f32 0.0, %v1214
    %v1216 = vpop.f32.mrb[0].mxu0
    %1217 = vdwg.mxu0
    %v1218 = vmul.f32 %v1215, 0.001953125
    %v1219 = vmul.f32 %v1147, %v1147
    %v1220 = vsub.f32 %v1218, %v1219
    %v1221 = vld [vmem:[%s6] sm:$0x1]
    %v1222 = vadd.f32 %v1220, 1e-05
    %v1223 = vrsqrt.pop %v1222
    %v1224 = vmul.f32 %v1221, %v1223
    %v1225 = vld [vmem:[%s7] sm:$0x1]
    %v1226 = vmul.f32 %v1147, %v1224
    %v1227 = vsub.f32 %v1225, %v1226
    %v1229 = vlaneseq
    %v1230 = vshrl.u32 %v1229, 7
    %v1231 = vsub.s32 0, %v1230
    %v1232 = vrot.slane %v1224, %v1231
    %v1234 = vmul.f32 %v1051, %v1232
    %v1235 = vmul.f32 %v1052, %v1232
    %v1236 = vmul.f32 %v1053, %v1232
    %v1237 = vmul.f32 %v1054, %v1232
    %v1239 = vlaneseq
    %v1240 = vshrl.u32 %v1239, 7
    %v1241 = vsub.s32 0, %v1240
    %v1242 = vrot.slane %v1227, %v1241
    %v1244 = vadd.f32 %v1234, %v1242
    %v1245 = vadd.f32 %v1235, %v1242
    %v1246 = vadd.f32 %v1236, %v1242
    %v1247 = vadd.f32 %v1237, %v1242
    %v1248 = vadd.f32 %v1244, %v85
    %v1249 = vadd.f32 %v1245, %v86
    %v1250 = vadd.f32 %v1246, %v87
    %v1251 = vadd.f32 %v1247, %v88
    %vm1252 = vcmp.gt.f32.partialorder %v1248, 0.0
    %vm1253 = vcmp.gt.f32.partialorder %v1249, 0.0
    %vm1254 = vcmp.gt.f32.partialorder %v1250, 0.0
    %vm1255 = vcmp.gt.f32.partialorder %v1251, 0.0
    %v1256 = vmul.f32 %v1248, 1.442695
    %v1257 = vpow.pop %v1256
    %v1258 = vmul.f32 %v1249, 1.442695
    %v1259 = vpow.pop %v1258
    %v1260 = vmul.f32 %v1250, 1.442695
    %v1261 = vpow.pop %v1260
    %v1262 = vmul.f32 %v1251, 1.442695
    %v1263 = vpow.pop %v1262
    %v1264 = vsub.f32 %v1257, 1.0
    %v1265 = vsub.f32 %v1259, 1.0
    %v1266 = vsub.f32 %v1261, 1.0
    %v1267 = vsub.f32 %v1263, 1.0
    %v1268 = vmul.f32 %v1264, 1.6732632
    %v1269 = vmul.f32 %v1265, 1.6732632
    %v1270 = vmul.f32 %v1266, 1.6732632
    %v1271 = vmul.f32 %v1267, 1.6732632
    %v1272 = vsel %vm1252, %v1248, %v1268
    %v1273 = vsel %vm1253, %v1249, %v1269
    %v1274 = vsel %vm1254, %v1250, %v1270
    %v1275 = vsel %vm1255, %v1251, %v1271
    %v1276 = vmul.f32 %v1272, 1.050701
    %v1277 = vmul.f32 %v1273, 1.050701
    %v1278 = vmul.f32 %v1274, 1.050701
    %v1279 = vmul.f32 %v1275, 1.050701
    %1280 = vst [vmem:[#allocation10] sm:$0xff] %v1276
    %1281 = vst [vmem:[#allocation10 + $0x8] sm:$0xff] %v1277
    %1282 = vst [vmem:[#allocation10 + $0x10] sm:$0xff] %v1278
    %1283 = vst [vmem:[#allocation10 + $0x18] sm:$0xff] %v1279
    // Predicated region
    $region50: #{tpu_custom_call.1} parent=1 // pred_check
      _
    $region51: #{tpu_custom_call.1} parent=1 // pred_check_branch
      %1285 = sbr.rel (0) target = $region53
    $region52: #{tpu_custom_call.1} parent=1 // pred_region
      %s1287 = ssub.s32 512, 512
      %1288 = vsyncadd [#allocation4], %s1287
      %s1289 = sshll.u32 [#allocation10], 4
      %s1290 = int_to_ptr.vmem [resolvable:$true] %s1289
      %1295 = dma.vmem_to_hbm [thread:$0]  %s1290, 512, %s8, [#allocation4], 128, 128, 8
    $region53: #{tpu_custom_call.1} parent=1 // pred_fallthru
      _
    // Predicated region
    $region54: #{tpu_custom_call.1} parent=1 // pred_check
      _
    $region55: #{tpu_custom_call.1} parent=1 // pred_check_branch
      %1297 = sbr.rel (0) target = $region57
    $region56: #{tpu_custom_call.1} parent=1 // pred_region
      %1298 = dma.done [#allocation4], 512
    $region57: #{tpu_custom_call.1} parent=1 // pred_fallthru
      _
    %1299 = vsyncpa [#allocation3], 1
    %1300 = vsyncpa [#allocation6], 1
    %1301 = vsyncpa [#allocation9], 1
    %1302 = vsyncpa [#allocation4], 1

</llo_original>
